<compile_context>
chip_gen: v5e
topology: v5e:2x2
jax: 0.10.0
libtpu: 0.0.40
codegen_flags: <defaults>
</compile_context>

<pallas_src>
import jax
import jax.numpy as jnp
from jax.experimental import pallas as pl
from jax.experimental.pallas import tpu as pltpu

C1 = 0.01 ** 2
C2 = 0.03 ** 2


def _ssim_kernel(x_ref, y_ref, out_ref):
    # x_ref / y_ref / out_ref: (Bp, H, W) blocks of image planes.
    _, H, W = out_ref.shape
    x = x_ref[...]
    y = y_ref[...]

    def reflect_pad(a):
        # 1-pixel reflect pad of the last two dims, built entirely in VMEM
        # (replaces the wrapper-side jnp.pad HBM round trip).
        a = jnp.concatenate([a[:, :, 1:2], a, a[:, :, W - 2:W - 1]], axis=2)
        a = jnp.concatenate([a[:, 1:2, :], a, a[:, H - 2:H - 1, :]], axis=1)
        return a

    xp = reflect_pad(x)          # (Bp, H+2, W+2)
    yp = reflect_pad(y)

    def pool3x3(ap):
        # Separable 3x3 average pool: 3-tap sum along lanes (W) then along
        # sublanes (H) -> 4 adds per pool instead of 8.
        h = ap[:, :, 0:W] + ap[:, :, 1:W + 1] + ap[:, :, 2:W + 2]   # (Bp, H+2, W)
        v = h[:, 0:H, :] + h[:, 1:H + 1, :] + h[:, 2:H + 2, :]      # (Bp, H,   W)
        return v * (1.0 / 9.0)

    mu_x = pool3x3(xp)
    mu_y = pool3x3(yp)
    sigma_x = pool3x3(xp * xp) - mu_x * mu_x
    sigma_y = pool3x3(yp * yp) - mu_y * mu_y
    sigma_xy = pool3x3(xp * yp) - mu_x * mu_y

    ssim_n = (2.0 * mu_x * mu_y + C1) * (2.0 * sigma_xy + C2)
    ssim_d = (mu_x * mu_x + mu_y * mu_y + C1) * (sigma_x + sigma_y + C2)

    # Exact divide: pl.reciprocal(..., approx=True) would break 1e-5 parity
    # with the reference.
    out_ref[...] = jnp.clip((1.0 - ssim_n / ssim_d) * 0.5, 0.0, 1.0)


# VMEM budget for one grid step, kept safe for v7x (64 MiB VMEM per TensorCore);
# v5e/v6e (128 MiB) simply have extra headroom with this sizing.
_VMEM_BUDGET_BYTES = 40 * 1024 * 1024


def _pick_plane_batch(nc, h, w, budget_bytes):
    """Largest divisor of `nc` whose per-step VMEM footprint fits the budget."""
    plane_bytes = (h + 2) * (w + 2) * 4
    # Rough per-plane footprint: 3 I/O blocks double-buffered (~6x plane) plus
    # ~16x f32 temporaries (padded planes, products, h-sums, pools, SSIM terms).
    max_bp = max(1, budget_bytes // (22 * plane_bytes))
    bp = 1
    for d in range(1, nc + 1):
        if nc % d == 0 and d <= max_bp:
            bp = d
    # Prefer >= 2 grid steps so both v7x TensorCores get work.
    if bp == nc and nc % 2 == 0:
        bp = nc // 2
    return bp, plane_bytes


def ssim_loss(x, y):
    """x, y: (N, C, H, W). Returns (N, C, H, W) SSIM loss, clamped to [0, 1]."""
    N, C, H, W = x.shape
    assert H >= 2 and W >= 2, "reflection pad of 1 needs H, W >= 2"
    NC = N * C

    x = x.astype(jnp.float32).reshape(NC, H, W)
    y = y.astype(jnp.float32).reshape(NC, H, W)

    bp, plane_bytes = _pick_plane_batch(NC, H, W, _VMEM_BUDGET_BYTES)
    grid = NC // bp

    # Only raise the scoped-VMEM limit when the blocks actually need it; the
    # cap of 48 MiB stays under v7x's 64 MiB physical VMEM per TensorCore.
    est_vmem = 22 * bp * plane_bytes
    vmem_limit = None
    if est_vmem > 24 * 1024 * 1024:
        vmem_limit = int(min(48 * 1024 * 1024,
                             max(32 * 1024 * 1024, est_vmem * 5 // 4)))

    # NOTE: for tiny W (< 128 lanes) the output stores are lane-sparse; folding
    # several planes into the lane axis would raise occupancy but is omitted to
    # keep exact reflect-pad semantics simple. Real image widths (>= 128) are
    # already lane-dense with this layout.

    out = pl.pallas_call(
        _ssim_kernel,
        out_shape=jax.ShapeDtypeStruct((NC, H, W), jnp.float32),
        grid_spec=pltpu.PrefetchScalarGridSpec(
            num_scalar_prefetch=0,
            grid=(grid,),
            in_specs=[
                pl.BlockSpec((bp, H, W), lambda i: (i, 0, 0)),
                pl.BlockSpec((bp, H, W), lambda i: (i, 0, 0)),
            ],
            out_specs=pl.BlockSpec((bp, H, W), lambda i: (i, 0, 0)),
        ),
        compiler_params=pltpu.CompilerParams(
            dimension_semantics=("parallel",),
            vmem_limit_bytes=vmem_limit,
        ),
    )(x, y)

    return out.reshape(N, C, H, W)


def _ssim_ref(x, y):
    """Pure-JAX reference mirroring the PyTorch module, for sanity check."""
    pad = ((0, 0), (0, 0), (1, 1), (1, 1))
    xp = jnp.pad(x, pad, mode="reflect")
    yp = jnp.pad(y, pad, mode="reflect")

    def pool(a):
        H, W = x.shape[2], x.shape[3]
        s = jnp.zeros_like(x)
        for di in range(3):
            for dj in range(3):
                s = s + a[:, :, di:di + H, dj:dj + W]
        return s / 9.0

    mu_x = pool(xp)
    mu_y = pool(yp)
    sigma_x = pool(xp * xp) - mu_x ** 2
    sigma_y = pool(yp * yp) - mu_y ** 2
    sigma_xy = pool(xp * yp) - mu_x * mu_y
    n = (2 * mu_x * mu_y + C1) * (2 * sigma_xy + C2)
    d = (mu_x ** 2 + mu_y ** 2 + C1) * (sigma_x + sigma_y + C2)
    return jnp.clip((1 - n / d) / 2, 0.0, 1.0)


if __name__ == "__main__":
    key = jax.random.PRNGKey(0)
    kx, ky = jax.random.split(key)
    N, C, H, W = 2, 4, 16, 16
    x = jax.random.uniform(kx, (N, C, H, W), dtype=jnp.float32)
    y = jax.random.uniform(ky, (N, C, H, W), dtype=jnp.float32)

    out = jax.block_until_ready(ssim_loss(x, y))
    ref = jax.block_until_ready(_ssim_ref(x, y))

    assert out.shape == (N, C, H, W)
    assert jnp.max(jnp.abs(out - ref)) < 1e-5

    print("KERNEL_OK")
</pallas_src>

<mosaic_0001>
module attributes {stable_mosaic.version = 11 : i64} {
  func.func @_ssim_kernel(%arg0: i32, %arg1: memref<4x16x16xf32, #tpu.memory_space<vmem>>, %arg2: memref<4x16x16xf32, #tpu.memory_space<vmem>>, %arg3: memref<4x16x16xf32, #tpu.memory_space<vmem>>) attributes {dimension_semantics = [#tpu.dimension_semantics<parallel>], iteration_bounds = array<i64: 2>, scalar_prefetch = 0 : i64, scratch_operands = 0 : i64, tpu.core_type = #tpu.core_type<tc>, window_params = [{transform_indices = @transform_0, window_bounds = array<i64: 4, 16, 16>}, {transform_indices = @transform_1, window_bounds = array<i64: 4, 16, 16>}, {transform_indices = @transform_2, window_bounds = array<i64: 4, 16, 16>}]} {
    %c0 = arith.constant 0 : index
    %c0_0 = arith.constant 0 : index
    %c0_1 = arith.constant 0 : index
    %0 = vector.load %arg1[%c0, %c0_0, %c0_1] : memref<4x16x16xf32, #tpu.memory_space<vmem>>, vector<4x16x16xf32>
    %c0_2 = arith.constant 0 : index
    %c0_3 = arith.constant 0 : index
    %c0_4 = arith.constant 0 : index
    %1 = vector.load %arg2[%c0_2, %c0_3, %c0_4] : memref<4x16x16xf32, #tpu.memory_space<vmem>>, vector<4x16x16xf32>
    %2 = vector.extract_strided_slice %0 {offsets = [0, 0, 1], sizes = [4, 16, 1], strides = [1, 1, 1]} : vector<4x16x16xf32> to vector<4x16x1xf32>
    %3 = vector.extract_strided_slice %0 {offsets = [0, 0, 14], sizes = [4, 16, 1], strides = [1, 1, 1]} : vector<4x16x16xf32> to vector<4x16x1xf32>
    %4 = tpu.concatenate %2, %0, %3 in 2 : vector<4x16x1xf32>, vector<4x16x16xf32>, vector<4x16x1xf32> -> vector<4x16x18xf32>
    %5 = vector.extract_strided_slice %4 {offsets = [0, 1, 0], sizes = [4, 1, 18], strides = [1, 1, 1]} : vector<4x16x18xf32> to vector<4x1x18xf32>
    %6 = vector.extract_strided_slice %4 {offsets = [0, 14, 0], sizes = [4, 1, 18], strides = [1, 1, 1]} : vector<4x16x18xf32> to vector<4x1x18xf32>
    %7 = tpu.concatenate %5, %4, %6 in 1 : vector<4x1x18xf32>, vector<4x16x18xf32>, vector<4x1x18xf32> -> vector<4x18x18xf32>
    %8 = vector.extract_strided_slice %1 {offsets = [0, 0, 1], sizes = [4, 16, 1], strides = [1, 1, 1]} : vector<4x16x16xf32> to vector<4x16x1xf32>
    %9 = vector.extract_strided_slice %1 {offsets = [0, 0, 14], sizes = [4, 16, 1], strides = [1, 1, 1]} : vector<4x16x16xf32> to vector<4x16x1xf32>
    %10 = tpu.concatenate %8, %1, %9 in 2 : vector<4x16x1xf32>, vector<4x16x16xf32>, vector<4x16x1xf32> -> vector<4x16x18xf32>
    %11 = vector.extract_strided_slice %10 {offsets = [0, 1, 0], sizes = [4, 1, 18], strides = [1, 1, 1]} : vector<4x16x18xf32> to vector<4x1x18xf32>
    %12 = vector.extract_strided_slice %10 {offsets = [0, 14, 0], sizes = [4, 1, 18], strides = [1, 1, 1]} : vector<4x16x18xf32> to vector<4x1x18xf32>
    %13 = tpu.concatenate %11, %10, %12 in 1 : vector<4x1x18xf32>, vector<4x16x18xf32>, vector<4x1x18xf32> -> vector<4x18x18xf32>
    %14 = vector.extract_strided_slice %7 {offsets = [0, 0, 0], sizes = [4, 18, 16], strides = [1, 1, 1]} : vector<4x18x18xf32> to vector<4x18x16xf32>
    %15 = vector.extract_strided_slice %7 {offsets = [0, 0, 1], sizes = [4, 18, 16], strides = [1, 1, 1]} : vector<4x18x18xf32> to vector<4x18x16xf32>
    %16 = arith.addf %14, %15 : vector<4x18x16xf32>
    %17 = vector.extract_strided_slice %7 {offsets = [0, 0, 2], sizes = [4, 18, 16], strides = [1, 1, 1]} : vector<4x18x18xf32> to vector<4x18x16xf32>
    %18 = arith.addf %16, %17 : vector<4x18x16xf32>
    %19 = vector.extract_strided_slice %18 {offsets = [0, 0, 0], sizes = [4, 16, 16], strides = [1, 1, 1]} : vector<4x18x16xf32> to vector<4x16x16xf32>
    %20 = vector.extract_strided_slice %18 {offsets = [0, 1, 0], sizes = [4, 16, 16], strides = [1, 1, 1]} : vector<4x18x16xf32> to vector<4x16x16xf32>
    %21 = arith.addf %19, %20 : vector<4x16x16xf32>
    %22 = vector.extract_strided_slice %18 {offsets = [0, 2, 0], sizes = [4, 16, 16], strides = [1, 1, 1]} : vector<4x18x16xf32> to vector<4x16x16xf32>
    %23 = arith.addf %21, %22 : vector<4x16x16xf32>
    %cst = arith.constant 0.111111112 : f32
    %24 = vector.broadcast %cst : f32 to vector<4x16x16xf32>
    %25 = arith.mulf %23, %24 : vector<4x16x16xf32>
    %26 = vector.extract_strided_slice %13 {offsets = [0, 0, 0], sizes = [4, 18, 16], strides = [1, 1, 1]} : vector<4x18x18xf32> to vector<4x18x16xf32>
    %27 = vector.extract_strided_slice %13 {offsets = [0, 0, 1], sizes = [4, 18, 16], strides = [1, 1, 1]} : vector<4x18x18xf32> to vector<4x18x16xf32>
    %28 = arith.addf %26, %27 : vector<4x18x16xf32>
    %29 = vector.extract_strided_slice %13 {offsets = [0, 0, 2], sizes = [4, 18, 16], strides = [1, 1, 1]} : vector<4x18x18xf32> to vector<4x18x16xf32>
    %30 = arith.addf %28, %29 : vector<4x18x16xf32>
    %31 = vector.extract_strided_slice %30 {offsets = [0, 0, 0], sizes = [4, 16, 16], strides = [1, 1, 1]} : vector<4x18x16xf32> to vector<4x16x16xf32>
    %32 = vector.extract_strided_slice %30 {offsets = [0, 1, 0], sizes = [4, 16, 16], strides = [1, 1, 1]} : vector<4x18x16xf32> to vector<4x16x16xf32>
    %33 = arith.addf %31, %32 : vector<4x16x16xf32>
    %34 = vector.extract_strided_slice %30 {offsets = [0, 2, 0], sizes = [4, 16, 16], strides = [1, 1, 1]} : vector<4x18x16xf32> to vector<4x16x16xf32>
    %35 = arith.addf %33, %34 : vector<4x16x16xf32>
    %cst_5 = arith.constant 0.111111112 : f32
    %36 = vector.broadcast %cst_5 : f32 to vector<4x16x16xf32>
    %37 = arith.mulf %35, %36 : vector<4x16x16xf32>
    %38 = arith.mulf %7, %7 : vector<4x18x18xf32>
    %39 = vector.extract_strided_slice %38 {offsets = [0, 0, 0], sizes = [4, 18, 16], strides = [1, 1, 1]} : vector<4x18x18xf32> to vector<4x18x16xf32>
    %40 = vector.extract_strided_slice %38 {offsets = [0, 0, 1], sizes = [4, 18, 16], strides = [1, 1, 1]} : vector<4x18x18xf32> to vector<4x18x16xf32>
    %41 = arith.addf %39, %40 : vector<4x18x16xf32>
    %42 = vector.extract_strided_slice %38 {offsets = [0, 0, 2], sizes = [4, 18, 16], strides = [1, 1, 1]} : vector<4x18x18xf32> to vector<4x18x16xf32>
    %43 = arith.addf %41, %42 : vector<4x18x16xf32>
    %44 = vector.extract_strided_slice %43 {offsets = [0, 0, 0], sizes = [4, 16, 16], strides = [1, 1, 1]} : vector<4x18x16xf32> to vector<4x16x16xf32>
    %45 = vector.extract_strided_slice %43 {offsets = [0, 1, 0], sizes = [4, 16, 16], strides = [1, 1, 1]} : vector<4x18x16xf32> to vector<4x16x16xf32>
    %46 = arith.addf %44, %45 : vector<4x16x16xf32>
    %47 = vector.extract_strided_slice %43 {offsets = [0, 2, 0], sizes = [4, 16, 16], strides = [1, 1, 1]} : vector<4x18x16xf32> to vector<4x16x16xf32>
    %48 = arith.addf %46, %47 : vector<4x16x16xf32>
    %cst_6 = arith.constant 0.111111112 : f32
    %49 = vector.broadcast %cst_6 : f32 to vector<4x16x16xf32>
    %50 = arith.mulf %48, %49 : vector<4x16x16xf32>
    %51 = arith.mulf %25, %25 : vector<4x16x16xf32>
    %52 = arith.subf %50, %51 : vector<4x16x16xf32>
    %53 = arith.mulf %13, %13 : vector<4x18x18xf32>
    %54 = vector.extract_strided_slice %53 {offsets = [0, 0, 0], sizes = [4, 18, 16], strides = [1, 1, 1]} : vector<4x18x18xf32> to vector<4x18x16xf32>
    %55 = vector.extract_strided_slice %53 {offsets = [0, 0, 1], sizes = [4, 18, 16], strides = [1, 1, 1]} : vector<4x18x18xf32> to vector<4x18x16xf32>
    %56 = arith.addf %54, %55 : vector<4x18x16xf32>
    %57 = vector.extract_strided_slice %53 {offsets = [0, 0, 2], sizes = [4, 18, 16], strides = [1, 1, 1]} : vector<4x18x18xf32> to vector<4x18x16xf32>
    %58 = arith.addf %56, %57 : vector<4x18x16xf32>
    %59 = vector.extract_strided_slice %58 {offsets = [0, 0, 0], sizes = [4, 16, 16], strides = [1, 1, 1]} : vector<4x18x16xf32> to vector<4x16x16xf32>
    %60 = vector.extract_strided_slice %58 {offsets = [0, 1, 0], sizes = [4, 16, 16], strides = [1, 1, 1]} : vector<4x18x16xf32> to vector<4x16x16xf32>
    %61 = arith.addf %59, %60 : vector<4x16x16xf32>
    %62 = vector.extract_strided_slice %58 {offsets = [0, 2, 0], sizes = [4, 16, 16], strides = [1, 1, 1]} : vector<4x18x16xf32> to vector<4x16x16xf32>
    %63 = arith.addf %61, %62 : vector<4x16x16xf32>
    %cst_7 = arith.constant 0.111111112 : f32
    %64 = vector.broadcast %cst_7 : f32 to vector<4x16x16xf32>
    %65 = arith.mulf %63, %64 : vector<4x16x16xf32>
    %66 = arith.mulf %37, %37 : vector<4x16x16xf32>
    %67 = arith.subf %65, %66 : vector<4x16x16xf32>
    %68 = arith.mulf %7, %13 : vector<4x18x18xf32>
    %69 = vector.extract_strided_slice %68 {offsets = [0, 0, 0], sizes = [4, 18, 16], strides = [1, 1, 1]} : vector<4x18x18xf32> to vector<4x18x16xf32>
    %70 = vector.extract_strided_slice %68 {offsets = [0, 0, 1], sizes = [4, 18, 16], strides = [1, 1, 1]} : vector<4x18x18xf32> to vector<4x18x16xf32>
    %71 = arith.addf %69, %70 : vector<4x18x16xf32>
    %72 = vector.extract_strided_slice %68 {offsets = [0, 0, 2], sizes = [4, 18, 16], strides = [1, 1, 1]} : vector<4x18x18xf32> to vector<4x18x16xf32>
    %73 = arith.addf %71, %72 : vector<4x18x16xf32>
    %74 = vector.extract_strided_slice %73 {offsets = [0, 0, 0], sizes = [4, 16, 16], strides = [1, 1, 1]} : vector<4x18x16xf32> to vector<4x16x16xf32>
    %75 = vector.extract_strided_slice %73 {offsets = [0, 1, 0], sizes = [4, 16, 16], strides = [1, 1, 1]} : vector<4x18x16xf32> to vector<4x16x16xf32>
    %76 = arith.addf %74, %75 : vector<4x16x16xf32>
    %77 = vector.extract_strided_slice %73 {offsets = [0, 2, 0], sizes = [4, 16, 16], strides = [1, 1, 1]} : vector<4x18x16xf32> to vector<4x16x16xf32>
    %78 = arith.addf %76, %77 : vector<4x16x16xf32>
    %cst_8 = arith.constant 0.111111112 : f32
    %79 = vector.broadcast %cst_8 : f32 to vector<4x16x16xf32>
    %80 = arith.mulf %78, %79 : vector<4x16x16xf32>
    %81 = arith.mulf %25, %37 : vector<4x16x16xf32>
    %82 = arith.subf %80, %81 : vector<4x16x16xf32>
    %cst_9 = arith.constant 2.000000e+00 : f32
    %83 = vector.broadcast %cst_9 : f32 to vector<4x16x16xf32>
    %84 = arith.mulf %83, %25 : vector<4x16x16xf32>
    %85 = arith.mulf %84, %37 : vector<4x16x16xf32>
    %cst_10 = arith.constant 9.99999974E-5 : f32
    %86 = vector.broadcast %cst_10 : f32 to vector<4x16x16xf32>
    %87 = arith.addf %85, %86 : vector<4x16x16xf32>
    %cst_11 = arith.constant 2.000000e+00 : f32
    %88 = vector.broadcast %cst_11 : f32 to vector<4x16x16xf32>
    %89 = arith.mulf %88, %82 : vector<4x16x16xf32>
    %cst_12 = arith.constant 8.99999984E-4 : f32
    %90 = vector.broadcast %cst_12 : f32 to vector<4x16x16xf32>
    %91 = arith.addf %89, %90 : vector<4x16x16xf32>
    %92 = arith.mulf %87, %91 : vector<4x16x16xf32>
    %93 = arith.mulf %25, %25 : vector<4x16x16xf32>
    %94 = arith.mulf %37, %37 : vector<4x16x16xf32>
    %95 = arith.addf %93, %94 : vector<4x16x16xf32>
    %cst_13 = arith.constant 9.99999974E-5 : f32
    %96 = vector.broadcast %cst_13 : f32 to vector<4x16x16xf32>
    %97 = arith.addf %95, %96 : vector<4x16x16xf32>
    %98 = arith.addf %52, %67 : vector<4x16x16xf32>
    %cst_14 = arith.constant 8.99999984E-4 : f32
    %99 = vector.broadcast %cst_14 : f32 to vector<4x16x16xf32>
    %100 = arith.addf %98, %99 : vector<4x16x16xf32>
    %101 = arith.mulf %97, %100 : vector<4x16x16xf32>
    %102 = arith.divf %92, %101 : vector<4x16x16xf32>
    %cst_15 = arith.constant 1.000000e+00 : f32
    %103 = vector.broadcast %cst_15 : f32 to vector<4x16x16xf32>
    %104 = arith.subf %103, %102 : vector<4x16x16xf32>
    %cst_16 = arith.constant 5.000000e-01 : f32
    %105 = vector.broadcast %cst_16 : f32 to vector<4x16x16xf32>
    %106 = arith.mulf %104, %105 : vector<4x16x16xf32>
    %cst_17 = arith.constant 0.000000e+00 : f32
    %cst_18 = arith.constant 1.000000e+00 : f32
    %107 = vector.broadcast %cst_17 : f32 to vector<4x16x16xf32>
    %108 = arith.maximumf %107, %106 : vector<4x16x16xf32>
    %109 = vector.broadcast %cst_18 : f32 to vector<4x16x16xf32>
    %110 = arith.minimumf %109, %108 : vector<4x16x16xf32>
    %c0_19 = arith.constant 0 : index
    %c0_20 = arith.constant 0 : index
    %c0_21 = arith.constant 0 : index
    %111 = vector.load %arg3[%c0_19, %c0_20, %c0_21] : memref<4x16x16xf32, #tpu.memory_space<vmem>>, vector<4x16x16xf32>
    tpu.vector_store %arg3[%c0_19, %c0_20, %c0_21], %110 {strides = array<i32>} : memref<4x16x16xf32, #tpu.memory_space<vmem>>, vector<4x16x16xf32>,
    return
  }
  func.func @transform_0(%arg0: i32) -> (i32, i32, i32) {
    %c0_i32 = arith.constant 0 : i32
    %c0_i32_0 = arith.constant 0 : i32
    %c0_i32_1 = arith.constant 0 : i32
    return %arg0, %c0_i32, %c0_i32_0 : i32, i32, i32
  }
  func.func @transform_1(%arg0: i32) -> (i32, i32, i32) {
    %c0_i32 = arith.constant 0 : i32
    %c0_i32_0 = arith.constant 0 : i32
    %c0_i32_1 = arith.constant 0 : i32
    return %arg0, %c0_i32, %c0_i32_0 : i32, i32, i32
  }
  func.func @transform_2(%arg0: i32) -> (i32, i32, i32) {
    %c0_i32 = arith.constant 0 : i32
    %c0_i32_0 = arith.constant 0 : i32
    %c0_i32_1 = arith.constant 0 : i32
    return %arg0, %c0_i32, %c0_i32_0 : i32, i32, i32
  }
}

</mosaic_0001>

<llo_original>
// kernel: tpu_custom_call.1
$region0: #{tpu_custom_call.1}
  #allocation0 [shape = 'u32[]', space=smem, size = 0x4, offset = 0x4, fixed_abs, tag = 'smem constant byte address 0x4 - core index']
  #allocation1 [shape = 'u32[72,128]{1,0:T(1,128)}', space=vmem, size = 0x9000, scoped, tag = 'internal scratch']
  %s0 = inlined_call_operand.hbm [shape: f32[8,16,16], index: 0, kind: input, shape index: {}]
  %s1 = inlined_call_operand.hbm [shape: f32[8,16,16], index: 1, kind: input, shape index: {}]
  %s2 = inlined_call_operand.hbm [shape: f32[8,16,16], index: 2, kind: output, shape index: {}]
  %s3 = sld [smem:[#allocation0]]
  $region49: #{tpu_custom_call.1} parent=0
    _
  %s5 = ssub.s32 1, %s3
  %s6 = scalar_select 0, %s5, %s3
  $region1: #{tpu_custom_call.1} parent=0
    #allocation2 [shape = 'u8[65536]{0}', space=vmem, size = 0x10000, scoped, tag = 'input window, operand 0']
    #allocation3 [shape = 's32[2]{0}', space=sflag, size = 0x8, scoped, tag = 'scoped memory for tpu_custom_call.1']
    #allocation4 [shape = 's32[2]{0}', space=sflag, size = 0x8, scoped, tag = 'scoped memory for tpu_custom_call.1']
    #allocation5 [shape = 'u8[65536]{0}', space=vmem, size = 0x10000, scoped, tag = 'input window, operand 1']
    #allocation6 [shape = 's32[2]{0}', space=sflag, size = 0x8, scoped, tag = 'scoped memory for tpu_custom_call.1']
    #allocation7 [shape = 'u8[65536]{0}', space=vmem, size = 0x10000, scoped, tag = 'output window, operand 0']
    %7 = vsyncpa [#allocation3], 0
    %s8 = scalar_lea.sflag [#allocation3], 1
    %9 = vsyncpa %s8, 0
    %10 = vsyncpa [#allocation6], 0
    %s11 = scalar_lea.sflag [#allocation6], 1
    %12 = vsyncpa %s11, 0
    %13 = vsyncpa [#allocation4], 0
    %s14 = scalar_lea.sflag [#allocation4], 1
    %15 = vsyncpa %s14, 0
    loop: start=0, step=1, limit=4
    $region2: #{tpu_custom_call.1} parent=1 // loop_pre_header
      _
    $region3: #{tpu_custom_call.1} parent=1 // loop_header
      %s17 = sphi 0, %s21
      %p18 = scmp.ge.s32.totalorder %s17, 4
      %s27 = sphi 0, %s29
      %s30 = sphi 0, %s27
      %s31 = sphi 0, %s30
      %s47 = sphi 0, %s31
      %s53 = sphi 0, %s55
      %s56 = sphi 0, %s53
      %s57 = sphi 0, %s56
      %s73 = sphi 0, %s57
      %s79 = sphi 0, %s81
      %s82 = sphi 0, %s79
      %s83 = sphi 0, %s82
      %s99 = sphi 0, %s83
    $region4: #{tpu_custom_call.1} parent=1 // loop_header_branch
      %20 = sbr.rel (%p18) target = $region8
    $region5: #{tpu_custom_call.1} parent=1 // loop_body
      %s22 = ssub.s32 %s17, 1
      %s23 = ssub.s32 %s17, 2
      %s24 = sadd.s32 %s17, 1
      %s25 = ssub.s32 %s17, %s24
      %p26 = scmp.eq.s32.totalorder %s25, 0
      %s28 = sadd.s32 %s27, 1
      %s29 = scalar_select %p26, %s27, %s28
      %p32 = pneg %p26
      %p33 = scmp.eq.s32.totalorder %s17, 1
      %p34 = por %p32, %p33
      %p35 = scmp.ne.s32.totalorder %s27, %s30
      %p36 = scmp.eq.s32.totalorder %s17, 0
      %p37 = por %p35, %p36
      %p38 = scmp.ne.s32.totalorder %s27, %s30
      %p39 = scmp.eq.s32.totalorder %s22, 1
      %p40 = por %p38, %p39
      %p41 = scmp.ne.s32.totalorder %s30, %s31
      %p42 = scmp.eq.s32.totalorder %s22, 0
      %p43 = por %p41, %p42
      %p44 = scmp.ne.s32.totalorder %s30, %s31
      %p45 = scmp.eq.s32.totalorder %s23, 1
      %p46 = por %p44, %p45
      %p48 = scmp.ne.s32.totalorder %s31, %s47
      %p49 = scmp.eq.s32.totalorder %s23, 0
      %p50 = por %p48, %p49
      %s51 = ssub.s32 %s17, %s24
      %p52 = scmp.eq.s32.totalorder %s51, 0
      %s54 = sadd.s32 %s53, 1
      %s55 = scalar_select %p52, %s53, %s54
      %p58 = pneg %p52
      %p59 = scmp.eq.s32.totalorder %s17, 1
      %p60 = por %p58, %p59
      %p61 = scmp.ne.s32.totalorder %s53, %s56
      %p62 = scmp.eq.s32.totalorder %s17, 0
      %p63 = por %p61, %p62
      %p64 = scmp.ne.s32.totalorder %s53, %s56
      %p65 = scmp.eq.s32.totalorder %s22, 1
      %p66 = por %p64, %p65
      %p67 = scmp.ne.s32.totalorder %s56, %s57
      %p68 = scmp.eq.s32.totalorder %s22, 0
      %p69 = por %p67, %p68
      %p70 = scmp.ne.s32.totalorder %s56, %s57
      %p71 = scmp.eq.s32.totalorder %s23, 1
      %p72 = por %p70, %p71
      %p74 = scmp.ne.s32.totalorder %s57, %s73
      %p75 = scmp.eq.s32.totalorder %s23, 0
      %p76 = por %p74, %p75
      %s77 = ssub.s32 %s17, %s24
      %p78 = scmp.eq.s32.totalorder %s77, 0
      %s80 = sadd.s32 %s79, 1
      %s81 = scalar_select %p78, %s79, %s80
      %p84 = pneg %p78
      %p85 = scmp.eq.s32.totalorder %s17, 1
      %p86 = por %p84, %p85
      %p87 = scmp.ne.s32.totalorder %s79, %s82
      %p88 = scmp.eq.s32.totalorder %s17, 0
      %p89 = por %p87, %p88
      %p90 = scmp.ne.s32.totalorder %s79, %s82
      %p91 = scmp.eq.s32.totalorder %s22, 1
      %p92 = por %p90, %p91
      %p93 = scmp.ne.s32.totalorder %s82, %s83
      %p94 = scmp.eq.s32.totalorder %s22, 0
      %p95 = por %p93, %p94
      %p96 = scmp.ne.s32.totalorder %s82, %s83
      %p97 = scmp.eq.s32.totalorder %s23, 1
      %p98 = por %p96, %p97
      %p100 = scmp.ne.s32.totalorder %s83, %s99
      %p101 = scmp.eq.s32.totalorder %s23, 0
      %p102 = por %p100, %p101
      %p103 = scmp.le.s32.totalorder 1, %s17
      %p104 = scmp.lt.s32.totalorder %s17, 3
      %p105 = pnand %p103, %p104
      %p106 = pneg %p105
      // Predicated region
      $region9: #{tpu_custom_call.1} parent=5 // pred_check
        _
      $region10: #{tpu_custom_call.1} parent=5 // pred_check_branch
        %108 = sbr.rel (%p105) target = $region12
      $region11: #{tpu_custom_call.1} parent=5 // pred_region
        %s109 = ssub.s32 %s17, 1
      $region12: #{tpu_custom_call.1} parent=5 // pred_fallthru
        _
      %p110 = scmp.lt.s32.totalorder %s17, 2
      // Predicated region
      $region13: #{tpu_custom_call.1} parent=5 // pred_check
        %p111 = pneg %p110
      $region14: #{tpu_custom_call.1} parent=5 // pred_check_branch
        %113 = sbr.rel (%p111) target = $region16
      $region15: #{tpu_custom_call.1} parent=5 // pred_region
        // Predicated region
        $region17: #{tpu_custom_call.1} parent=15 // pred_check
          %p114 = pneg %p37
        $region18: #{tpu_custom_call.1} parent=15 // pred_check_branch
          %116 = sbr.rel (%p114) target = $region20
        $region19: #{tpu_custom_call.1} parent=15 // pred_region
          %s117 = sand.u32 %s27, 1
          %s118 = scalar_lea.sflag [#allocation3], %s117
          %s119 = sand.u32 %s27, 1
          %s120 = smul.addr %s119, 64
          %s121 = scalar_lea.vmem [#allocation2], %s120
          %s122 = smul.u32 4, %s17
          %124 = vsyncadd %s118, 0
          %s125 = smul.addr %s122, 2
          %s126 = smul.addr %s125, 8
          %s127 = scalar_lea.hbm %s0, %s126
          %s128 = sshll.u32 %s127, 4
          %s129 = int_to_ptr.hbm [resolvable:$true] %s128
          %s130 = sshll.u32 %s121, 4
          %s131 = int_to_ptr.vmem [resolvable:$true] %s130
          %136 = dma.hbm_to_vmem [thread:$0]  %s129, 1024, %s131, %s118, 128, 128, 8
        $region20: #{tpu_custom_call.1} parent=15 // pred_fallthru
          _
        // Predicated region
        $region21: #{tpu_custom_call.1} parent=15 // pred_check
          %p137 = pneg %p63
        $region22: #{tpu_custom_call.1} parent=15 // pred_check_branch
          %139 = sbr.rel (%p137) target = $region24
        $region23: #{tpu_custom_call.1} parent=15 // pred_region
          %s140 = sand.u32 %s53, 1
          %s141 = scalar_lea.sflag [#allocation6], %s140
          %s142 = sand.u32 %s53, 1
          %s143 = smul.addr %s142, 64
          %s144 = scalar_lea.vmem [#allocation5], %s143
          %s145 = smul.u32 4, %s17
          %147 = vsyncadd %s141, 0
          %s148 = smul.addr %s145, 2
          %s149 = smul.addr %s148, 8
          %s150 = scalar_lea.hbm %s1, %s149
          %s151 = sshll.u32 %s150, 4
          %s152 = int_to_ptr.hbm [resolvable:$true] %s151
          %s153 = sshll.u32 %s144, 4
          %s154 = int_to_ptr.vmem [resolvable:$true] %s153
          %159 = dma.hbm_to_vmem [thread:$0]  %s152, 1024, %s154, %s141, 128, 128, 8
        $region24: #{tpu_custom_call.1} parent=15 // pred_fallthru
          _
      $region16: #{tpu_custom_call.1} parent=5 // pred_fallthru
        _
      %p160 = scmp.le.s32.totalorder 1, %s17
      %p161 = scmp.lt.s32.totalorder %s17, 3
      %p162 = pnand %p160, %p161
      %p163 = pneg %p162
      // Predicated region
      $region25: #{tpu_custom_call.1} parent=5 // pred_check
        _
      $region26: #{tpu_custom_call.1} parent=5 // pred_check_branch
        %165 = sbr.rel (%p162) target = $region28
      $region27: #{tpu_custom_call.1} parent=5 // pred_region
        %s166 = ssub.s32 %s17, 1
        %s167 = sand.u32 %s30, 1
        %s168 = scalar_lea.sflag [#allocation3], %s167
        %s169 = sand.u32 %s30, 1
        %s170 = smul.addr %s169, 64
        %s171 = scalar_lea.vmem [#allocation2], %s170
        // Predicated region
        $region29: #{tpu_custom_call.1} parent=27 // pred_check
          %p172 = pneg %p43
        $region30: #{tpu_custom_call.1} parent=27 // pred_check_branch
          %174 = sbr.rel (%p172) target = $region32
        $region31: #{tpu_custom_call.1} parent=27 // pred_region
          %176 = dma.done %s168, 1024
        $region32: #{tpu_custom_call.1} parent=27 // pred_fallthru
          _
        %s177 = sand.u32 %s56, 1
        %s178 = scalar_lea.sflag [#allocation6], %s177
        %s179 = sand.u32 %s56, 1
        %s180 = smul.addr %s179, 64
        %s181 = scalar_lea.vmem [#allocation5], %s180
        // Predicated region
        $region33: #{tpu_custom_call.1} parent=27 // pred_check
          %p182 = pneg %p69
        $region34: #{tpu_custom_call.1} parent=27 // pred_check_branch
          %184 = sbr.rel (%p182) target = $region36
        $region35: #{tpu_custom_call.1} parent=27 // pred_region
          %186 = dma.done %s178, 1024
        $region36: #{tpu_custom_call.1} parent=27 // pred_fallthru
          _
        %s187 = sand.u32 %s30, 1
        %s188 = scalar_lea.sflag [#allocation3], %s187
        %s189 = sand.u32 %s30, 1
        %s190 = smul.addr %s189, 64
        %s191 = scalar_lea.vmem [#allocation2], %s190
        %p192 = pneg %p43
        %p193 = pneg %p40
        %s194 = sand.u32 %s56, 1
        %s195 = scalar_lea.sflag [#allocation6], %s194
        %s196 = sand.u32 %s56, 1
        %s197 = smul.addr %s196, 64
        %s198 = scalar_lea.vmem [#allocation5], %s197
        %p199 = pneg %p69
        %p200 = pneg %p66
        %p201 = pneg %p95
        %p202 = pneg %p92
        %s203 = sand.u32 %s82, 1
        %s204 = scalar_lea.sflag [#allocation4], %s203
        %s205 = sand.u32 %s82, 1
        %s206 = smul.addr %s205, 64
        %s207 = scalar_lea.vmem [#allocation7], %s206
        %s208 = smul.u32 4, %s22
        %s209 = smul.u32 4, %s22
        %s210 = smul.u32 4, %s22
        %v211 = vld [vmem:[%s171] sm:$0xff]
        %v212 = vld [vmem:[%s171 + $0x8] sm:$0xff]
        %v213 = vld [vmem:[%s171 + $0x10] sm:$0xff]
        %v214 = vld [vmem:[%s171 + $0x18] sm:$0xff]
        %v215 = vld [vmem:[%s171 + $0x20] sm:$0xff]
        %v216 = vld [vmem:[%s171 + $0x28] sm:$0xff]
        %v217 = vld [vmem:[%s171 + $0x30] sm:$0xff]
        %v218 = vld [vmem:[%s171 + $0x38] sm:$0xff]
        %v219 = vld [vmem:[%s181] sm:$0xff]
        %v220 = vld [vmem:[%s181 + $0x8] sm:$0xff]
        %v221 = vld [vmem:[%s181 + $0x10] sm:$0xff]
        %v222 = vld [vmem:[%s181 + $0x18] sm:$0xff]
        %v223 = vld [vmem:[%s181 + $0x20] sm:$0xff]
        %v224 = vld [vmem:[%s181 + $0x28] sm:$0xff]
        %v225 = vld [vmem:[%s181 + $0x30] sm:$0xff]
        %v226 = vld [vmem:[%s181 + $0x38] sm:$0xff]
        %235 = vrot.lane.b32.xlu0 %v211, 127
        %v236 = vpop.permute.xlu0 %235
        %237 = vrot.lane.b32.xlu0 %v212, 127
        %v238 = vpop.permute.xlu0 %237
        %239 = vrot.lane.b32.xlu0 %v213, 127
        %v240 = vpop.permute.xlu0 %239
        %241 = vrot.lane.b32.xlu0 %v214, 127
        %v242 = vpop.permute.xlu0 %241
        %243 = vrot.lane.b32.xlu0 %v215, 127
        %v244 = vpop.permute.xlu0 %243
        %245 = vrot.lane.b32.xlu0 %v216, 127
        %v246 = vpop.permute.xlu0 %245
        %247 = vrot.lane.b32.xlu0 %v217, 127
        %v248 = vpop.permute.xlu0 %247
        %249 = vrot.lane.b32.xlu0 %v218, 127
        %v250 = vpop.permute.xlu0 %249
        %259 = vrot.lane.b32.xlu0 %v211, 1
        %v260 = vpop.permute.xlu0 %259
        %261 = vrot.lane.b32.xlu0 %v212, 1
        %v262 = vpop.permute.xlu0 %261
        %263 = vrot.lane.b32.xlu0 %v213, 1
        %v264 = vpop.permute.xlu0 %263
        %265 = vrot.lane.b32.xlu0 %v214, 1
        %v266 = vpop.permute.xlu0 %265
        %267 = vrot.lane.b32.xlu0 %v215, 1
        %v268 = vpop.permute.xlu0 %267
        %269 = vrot.lane.b32.xlu0 %v216, 1
        %v270 = vpop.permute.xlu0 %269
        %271 = vrot.lane.b32.xlu0 %v217, 1
        %v272 = vpop.permute.xlu0 %271
        %273 = vrot.lane.b32.xlu0 %v218, 1
        %v274 = vpop.permute.xlu0 %273
        %283 = vrot.lane.b32.xlu0 %v211, 3
        %v284 = vpop.permute.xlu0 %283
        %285 = vrot.lane.b32.xlu0 %v212, 3
        %v286 = vpop.permute.xlu0 %285
        %287 = vrot.lane.b32.xlu0 %v213, 3
        %v288 = vpop.permute.xlu0 %287
        %289 = vrot.lane.b32.xlu0 %v214, 3
        %v290 = vpop.permute.xlu0 %289
        %291 = vrot.lane.b32.xlu0 %v215, 3
        %v292 = vpop.permute.xlu0 %291
        %293 = vrot.lane.b32.xlu0 %v216, 3
        %v294 = vpop.permute.xlu0 %293
        %295 = vrot.lane.b32.xlu0 %v217, 3
        %v296 = vpop.permute.xlu0 %295
        %297 = vrot.lane.b32.xlu0 %v218, 3
        %v298 = vpop.permute.xlu0 %297
        %vm307 = vcmask 7168
        %v308 = vsel %vm307, %v236, %v260
        %v309 = vsel %vm307, %v238, %v262
        %v310 = vsel %vm307, %v240, %v264
        %v311 = vsel %vm307, %v242, %v266
        %v312 = vsel %vm307, %v244, %v268
        %v313 = vsel %vm307, %v246, %v270
        %v314 = vsel %vm307, %v248, %v272
        %v315 = vsel %vm307, %v250, %v274
        %vm316 = vcmask 138240
        %v317 = vsel %vm316, %v308, %v284
        %v318 = vsel %vm316, %v309, %v286
        %v319 = vsel %vm316, %v310, %v288
        %v320 = vsel %vm316, %v311, %v290
        %v321 = vsel %vm316, %v312, %v292
        %v322 = vsel %vm316, %v313, %v294
        %v323 = vsel %vm316, %v314, %v296
        %v324 = vsel %vm316, %v315, %v298
        %v329 = vrot.slane %v317, 1
        %v330 = vrot.slane %v319, 1
        %v331 = vrot.slane %v321, 1
        %v332 = vrot.slane %v323, 1
        %vm341 = vcmask 1040384
        %v342 = vrot.slane %v317, 7
        %v343 = vrot.slane %v318, 7
        %v344 = vsel %vm341, %v342, %v343
        %v345 = vrot.slane %v319, 7
        %v346 = vrot.slane %v320, 7
        %v347 = vsel %vm341, %v345, %v346
        %v348 = vrot.slane %v321, 7
        %v349 = vrot.slane %v322, 7
        %v350 = vsel %vm341, %v348, %v349
        %v351 = vrot.slane %v323, 7
        %v352 = vrot.slane %v324, 7
        %v353 = vsel %vm341, %v351, %v352
        %v366 = vrot.slane %v318, 5
        %v367 = vrot.slane %v320, 5
        %v368 = vrot.slane %v322, 5
        %v369 = vrot.slane %v324, 5
        %v374 = vsel %vm341, %v329, %v342
        %v375 = vsel %vm341, %v330, %v345
        %v376 = vsel %vm341, %v331, %v348
        %v377 = vsel %vm341, %v332, %v351
        %v378 = vsel %vm341, %v343, %v366
        %v379 = vsel %vm341, %v346, %v367
        %v380 = vsel %vm341, %v349, %v368
        %v381 = vsel %vm341, %v352, %v369
        %390 = vrot.lane.b32.xlu0 %v219, 127
        %v391 = vpop.permute.xlu0 %390
        %392 = vrot.lane.b32.xlu0 %v220, 127
        %v393 = vpop.permute.xlu0 %392
        %394 = vrot.lane.b32.xlu0 %v221, 127
        %v395 = vpop.permute.xlu0 %394
        %396 = vrot.lane.b32.xlu0 %v222, 127
        %v397 = vpop.permute.xlu0 %396
        %398 = vrot.lane.b32.xlu0 %v223, 127
        %v399 = vpop.permute.xlu0 %398
        %400 = vrot.lane.b32.xlu0 %v224, 127
        %v401 = vpop.permute.xlu0 %400
        %402 = vrot.lane.b32.xlu0 %v225, 127
        %v403 = vpop.permute.xlu0 %402
        %404 = vrot.lane.b32.xlu0 %v226, 127
        %v405 = vpop.permute.xlu0 %404
        %414 = vrot.lane.b32.xlu0 %v219, 1
        %v415 = vpop.permute.xlu0 %414
        %416 = vrot.lane.b32.xlu0 %v220, 1
        %v417 = vpop.permute.xlu0 %416
        %418 = vrot.lane.b32.xlu0 %v221, 1
        %v419 = vpop.permute.xlu0 %418
        %420 = vrot.lane.b32.xlu0 %v222, 1
        %v421 = vpop.permute.xlu0 %420
        %422 = vrot.lane.b32.xlu0 %v223, 1
        %v423 = vpop.permute.xlu0 %422
        %424 = vrot.lane.b32.xlu0 %v224, 1
        %v425 = vpop.permute.xlu0 %424
        %426 = vrot.lane.b32.xlu0 %v225, 1
        %v427 = vpop.permute.xlu0 %426
        %428 = vrot.lane.b32.xlu0 %v226, 1
        %v429 = vpop.permute.xlu0 %428
        %438 = vrot.lane.b32.xlu0 %v219, 3
        %v439 = vpop.permute.xlu0 %438
        %440 = vrot.lane.b32.xlu0 %v220, 3
        %v441 = vpop.permute.xlu0 %440
        %442 = vrot.lane.b32.xlu0 %v221, 3
        %v443 = vpop.permute.xlu0 %442
        %444 = vrot.lane.b32.xlu0 %v222, 3
        %v445 = vpop.permute.xlu0 %444
        %446 = vrot.lane.b32.xlu0 %v223, 3
        %v447 = vpop.permute.xlu0 %446
        %448 = vrot.lane.b32.xlu0 %v224, 3
        %v449 = vpop.permute.xlu0 %448
        %450 = vrot.lane.b32.xlu0 %v225, 3
        %v451 = vpop.permute.xlu0 %450
        %452 = vrot.lane.b32.xlu0 %v226, 3
        %v453 = vpop.permute.xlu0 %452
        %v462 = vsel %vm307, %v391, %v415
        %v463 = vsel %vm307, %v393, %v417
        %v464 = vsel %vm307, %v395, %v419
        %v465 = vsel %vm307, %v397, %v421
        %v466 = vsel %vm307, %v399, %v423
        %v467 = vsel %vm307, %v401, %v425
        %v468 = vsel %vm307, %v403, %v427
        %v469 = vsel %vm307, %v405, %v429
        %v470 = vsel %vm316, %v462, %v439
        %v471 = vsel %vm316, %v463, %v441
        %v472 = vsel %vm316, %v464, %v443
        %v473 = vsel %vm316, %v465, %v445
        %v474 = vsel %vm316, %v466, %v447
        %v475 = vsel %vm316, %v467, %v449
        %v476 = vsel %vm316, %v468, %v451
        %v477 = vsel %vm316, %v469, %v453
        %v482 = vrot.slane %v470, 1
        %v483 = vrot.slane %v472, 1
        %v484 = vrot.slane %v474, 1
        %v485 = vrot.slane %v476, 1
        %v494 = vrot.slane %v470, 7
        %v495 = vrot.slane %v471, 7
        %v496 = vsel %vm341, %v494, %v495
        %v497 = vrot.slane %v472, 7
        %v498 = vrot.slane %v473, 7
        %v499 = vsel %vm341, %v497, %v498
        %v500 = vrot.slane %v474, 7
        %v501 = vrot.slane %v475, 7
        %v502 = vsel %vm341, %v500, %v501
        %v503 = vrot.slane %v476, 7
        %v504 = vrot.slane %v477, 7
        %v505 = vsel %vm341, %v503, %v504
        %v518 = vrot.slane %v471, 5
        %v519 = vrot.slane %v473, 5
        %v520 = vrot.slane %v475, 5
        %v521 = vrot.slane %v477, 5
        %v526 = vsel %vm341, %v482, %v494
        %v527 = vsel %vm341, %v483, %v497
        %v528 = vsel %vm341, %v484, %v500
        %v529 = vsel %vm341, %v485, %v503
        %v530 = vsel %vm341, %v495, %v518
        %v531 = vsel %vm341, %v498, %v519
        %v532 = vsel %vm341, %v501, %v520
        %v533 = vsel %vm341, %v504, %v521
        %542 = vrot.lane.b32.xlu0 %v374, 127
        %v543 = vpop.permute.xlu0 %542
        %544 = vrot.lane.b32.xlu0 %v344, 127
        %v545 = vpop.permute.xlu0 %544
        %546 = vrot.lane.b32.xlu0 %v378, 127
        %v547 = vpop.permute.xlu0 %546
        %548 = vrot.lane.b32.xlu0 %v375, 127
        %v549 = vpop.permute.xlu0 %548
        %550 = vrot.lane.b32.xlu0 %v347, 127
        %v551 = vpop.permute.xlu0 %550
        %552 = vrot.lane.b32.xlu0 %v379, 127
        %v553 = vpop.permute.xlu0 %552
        %554 = vrot.lane.b32.xlu0 %v376, 127
        %v555 = vpop.permute.xlu0 %554
        %556 = vrot.lane.b32.xlu0 %v350, 127
        %v557 = vpop.permute.xlu0 %556
        %558 = vrot.lane.b32.xlu0 %v380, 127
        %v559 = vpop.permute.xlu0 %558
        %560 = vrot.lane.b32.xlu0 %v377, 127
        %v561 = vpop.permute.xlu0 %560
        %562 = vrot.lane.b32.xlu0 %v353, 127
        %v563 = vpop.permute.xlu0 %562
        %564 = vrot.lane.b32.xlu0 %v381, 127
        %v565 = vpop.permute.xlu0 %564
        %v578 = vadd.f32 %v374, %v543
        %v579 = vadd.f32 %v344, %v545
        %v580 = vadd.f32 %v378, %v547
        %v581 = vadd.f32 %v375, %v549
        %v582 = vadd.f32 %v347, %v551
        %v583 = vadd.f32 %v379, %v553
        %v584 = vadd.f32 %v376, %v555
        %v585 = vadd.f32 %v350, %v557
        %v586 = vadd.f32 %v380, %v559
        %v587 = vadd.f32 %v377, %v561
        %v588 = vadd.f32 %v353, %v563
        %v589 = vadd.f32 %v381, %v565
        %590 = vrot.lane.b32.xlu0 %v374, 126
        %v591 = vpop.permute.xlu0 %590
        %592 = vrot.lane.b32.xlu0 %v344, 126
        %v593 = vpop.permute.xlu0 %592
        %594 = vrot.lane.b32.xlu0 %v378, 126
        %v595 = vpop.permute.xlu0 %594
        %596 = vrot.lane.b32.xlu0 %v375, 126
        %v597 = vpop.permute.xlu0 %596
        %598 = vrot.lane.b32.xlu0 %v347, 126
        %v599 = vpop.permute.xlu0 %598
        %600 = vrot.lane.b32.xlu0 %v379, 126
        %v601 = vpop.permute.xlu0 %600
        %602 = vrot.lane.b32.xlu0 %v376, 126
        %v603 = vpop.permute.xlu0 %602
        %604 = vrot.lane.b32.xlu0 %v350, 126
        %v605 = vpop.permute.xlu0 %604
        %606 = vrot.lane.b32.xlu0 %v380, 126
        %v607 = vpop.permute.xlu0 %606
        %608 = vrot.lane.b32.xlu0 %v377, 126
        %v609 = vpop.permute.xlu0 %608
        %610 = vrot.lane.b32.xlu0 %v353, 126
        %v611 = vpop.permute.xlu0 %610
        %612 = vrot.lane.b32.xlu0 %v381, 126
        %v613 = vpop.permute.xlu0 %612
        %v626 = vadd.f32 %v578, %v591
        %v627 = vadd.f32 %v579, %v593
        %v628 = vadd.f32 %v580, %v595
        %v629 = vadd.f32 %v581, %v597
        %v630 = vadd.f32 %v582, %v599
        %v631 = vadd.f32 %v583, %v601
        %v632 = vadd.f32 %v584, %v603
        %v633 = vadd.f32 %v585, %v605
        %v634 = vadd.f32 %v586, %v607
        %v635 = vadd.f32 %v587, %v609
        %v636 = vadd.f32 %v588, %v611
        %v637 = vadd.f32 %v589, %v613
        %vm650 = vcmask 1046528
        %v651 = vrot.slane %v626, 1
        %v652 = vrot.slane %v627, 1
        %v653 = vsel %vm650, %v651, %v652
        %v654 = vrot.slane %v628, 1
        %v655 = vsel %vm650, %v652, %v654
        %v656 = vrot.slane %v629, 1
        %v657 = vrot.slane %v630, 1
        %v658 = vsel %vm650, %v656, %v657
        %v659 = vrot.slane %v631, 1
        %v660 = vsel %vm650, %v657, %v659
        %v661 = vrot.slane %v632, 1
        %v662 = vrot.slane %v633, 1
        %v663 = vsel %vm650, %v661, %v662
        %v664 = vrot.slane %v634, 1
        %v665 = vsel %vm650, %v662, %v664
        %v666 = vrot.slane %v635, 1
        %v667 = vrot.slane %v636, 1
        %v668 = vsel %vm650, %v666, %v667
        %v669 = vrot.slane %v637, 1
        %v670 = vsel %vm650, %v667, %v669
        %v679 = vadd.f32 %v626, %v653
        %v680 = vadd.f32 %v627, %v655
        %v681 = vadd.f32 %v629, %v658
        %v682 = vadd.f32 %v630, %v660
        %v683 = vadd.f32 %v632, %v663
        %v684 = vadd.f32 %v633, %v665
        %v685 = vadd.f32 %v635, %v668
        %v686 = vadd.f32 %v636, %v670
        %vm687 = vcmask 1045504
        %v688 = vrot.slane %v626, 2
        %v689 = vrot.slane %v627, 2
        %v690 = vsel %vm687, %v688, %v689
        %v691 = vrot.slane %v628, 2
        %v692 = vsel %vm687, %v689, %v691
        %v693 = vrot.slane %v629, 2
        %v694 = vrot.slane %v630, 2
        %v695 = vsel %vm687, %v693, %v694
        %v696 = vrot.slane %v631, 2
        %v697 = vsel %vm687, %v694, %v696
        %v698 = vrot.slane %v632, 2
        %v699 = vrot.slane %v633, 2
        %v700 = vsel %vm687, %v698, %v699
        %v701 = vrot.slane %v634, 2
        %v702 = vsel %vm687, %v699, %v701
        %v703 = vrot.slane %v635, 2
        %v704 = vrot.slane %v636, 2
        %v705 = vsel %vm687, %v703, %v704
        %v706 = vrot.slane %v637, 2
        %v707 = vsel %vm687, %v704, %v706
        %v716 = vadd.f32 %v679, %v690
        %v717 = vadd.f32 %v680, %v692
        %v718 = vadd.f32 %v681, %v695
        %v719 = vadd.f32 %v682, %v697
        %v720 = vadd.f32 %v683, %v700
        %v721 = vadd.f32 %v684, %v702
        %v722 = vadd.f32 %v685, %v705
        %v723 = vadd.f32 %v686, %v707
        %v724 = vmul.f32 %v716, 0.11111111
        %v725 = vmul.f32 %v717, 0.11111111
        %v726 = vmul.f32 %v718, 0.11111111
        %v727 = vmul.f32 %v719, 0.11111111
        %v728 = vmul.f32 %v720, 0.11111111
        %v729 = vmul.f32 %v721, 0.11111111
        %v730 = vmul.f32 %v722, 0.11111111
        %v731 = vmul.f32 %v723, 0.11111111
        %740 = vrot.lane.b32.xlu0 %v526, 127
        %v741 = vpop.permute.xlu0 %740
        %742 = vrot.lane.b32.xlu0 %v496, 127
        %v743 = vpop.permute.xlu0 %742
        %744 = vrot.lane.b32.xlu0 %v530, 127
        %v745 = vpop.permute.xlu0 %744
        %746 = vrot.lane.b32.xlu0 %v527, 127
        %v747 = vpop.permute.xlu0 %746
        %748 = vrot.lane.b32.xlu0 %v499, 127
        %v749 = vpop.permute.xlu0 %748
        %750 = vrot.lane.b32.xlu0 %v531, 127
        %v751 = vpop.permute.xlu0 %750
        %752 = vrot.lane.b32.xlu0 %v528, 127
        %v753 = vpop.permute.xlu0 %752
        %754 = vrot.lane.b32.xlu0 %v502, 127
        %v755 = vpop.permute.xlu0 %754
        %756 = vrot.lane.b32.xlu0 %v532, 127
        %v757 = vpop.permute.xlu0 %756
        %758 = vrot.lane.b32.xlu0 %v529, 127
        %v759 = vpop.permute.xlu0 %758
        %760 = vrot.lane.b32.xlu0 %v505, 127
        %v761 = vpop.permute.xlu0 %760
        %762 = vrot.lane.b32.xlu0 %v533, 127
        %v763 = vpop.permute.xlu0 %762
        %v776 = vadd.f32 %v526, %v741
        %v777 = vadd.f32 %v496, %v743
        %v778 = vadd.f32 %v530, %v745
        %v779 = vadd.f32 %v527, %v747
        %v780 = vadd.f32 %v499, %v749
        %v781 = vadd.f32 %v531, %v751
        %v782 = vadd.f32 %v528, %v753
        %v783 = vadd.f32 %v502, %v755
        %v784 = vadd.f32 %v532, %v757
        %v785 = vadd.f32 %v529, %v759
        %v786 = vadd.f32 %v505, %v761
        %v787 = vadd.f32 %v533, %v763
        %788 = vrot.lane.b32.xlu0 %v526, 126
        %v789 = vpop.permute.xlu0 %788
        %790 = vrot.lane.b32.xlu0 %v496, 126
        %v791 = vpop.permute.xlu0 %790
        %792 = vrot.lane.b32.xlu0 %v530, 126
        %v793 = vpop.permute.xlu0 %792
        %794 = vrot.lane.b32.xlu0 %v527, 126
        %v795 = vpop.permute.xlu0 %794
        %796 = vrot.lane.b32.xlu0 %v499, 126
        %v797 = vpop.permute.xlu0 %796
        %798 = vrot.lane.b32.xlu0 %v531, 126
        %v799 = vpop.permute.xlu0 %798
        %800 = vrot.lane.b32.xlu0 %v528, 126
        %v801 = vpop.permute.xlu0 %800
        %802 = vrot.lane.b32.xlu0 %v502, 126
        %v803 = vpop.permute.xlu0 %802
        %804 = vrot.lane.b32.xlu0 %v532, 126
        %v805 = vpop.permute.xlu0 %804
        %806 = vrot.lane.b32.xlu0 %v529, 126
        %v807 = vpop.permute.xlu0 %806
        %808 = vrot.lane.b32.xlu0 %v505, 126
        %v809 = vpop.permute.xlu0 %808
        %810 = vrot.lane.b32.xlu0 %v533, 126
        %v811 = vpop.permute.xlu0 %810
        %v824 = vadd.f32 %v776, %v789
        %v825 = vadd.f32 %v777, %v791
        %v826 = vadd.f32 %v778, %v793
        %v827 = vadd.f32 %v779, %v795
        %v828 = vadd.f32 %v780, %v797
        %v829 = vadd.f32 %v781, %v799
        %v830 = vadd.f32 %v782, %v801
        %v831 = vadd.f32 %v783, %v803
        %v832 = vadd.f32 %v784, %v805
        %v833 = vadd.f32 %v785, %v807
        %v834 = vadd.f32 %v786, %v809
        %v835 = vadd.f32 %v787, %v811
        %v848 = vrot.slane %v824, 1
        %v849 = vrot.slane %v825, 1
        %v850 = vsel %vm650, %v848, %v849
        %v851 = vrot.slane %v826, 1
        %v852 = vsel %vm650, %v849, %v851
        %v853 = vrot.slane %v827, 1
        %v854 = vrot.slane %v828, 1
        %v855 = vsel %vm650, %v853, %v854
        %v856 = vrot.slane %v829, 1
        %v857 = vsel %vm650, %v854, %v856
        %v858 = vrot.slane %v830, 1
        %v859 = vrot.slane %v831, 1
        %v860 = vsel %vm650, %v858, %v859
        %v861 = vrot.slane %v832, 1
        %v862 = vsel %vm650, %v859, %v861
        %v863 = vrot.slane %v833, 1
        %v864 = vrot.slane %v834, 1
        %v865 = vsel %vm650, %v863, %v864
        %v866 = vrot.slane %v835, 1
        %v867 = vsel %vm650, %v864, %v866
        %v876 = vadd.f32 %v824, %v850
        %v877 = vadd.f32 %v825, %v852
        %v878 = vadd.f32 %v827, %v855
        %v879 = vadd.f32 %v828, %v857
        %v880 = vadd.f32 %v830, %v860
        %v881 = vadd.f32 %v831, %v862
        %v882 = vadd.f32 %v833, %v865
        %v883 = vadd.f32 %v834, %v867
        %v884 = vrot.slane %v824, 2
        %v885 = vrot.slane %v825, 2
        %v886 = vsel %vm687, %v884, %v885
        %v887 = vrot.slane %v826, 2
        %v888 = vsel %vm687, %v885, %v887
        %v889 = vrot.slane %v827, 2
        %v890 = vrot.slane %v828, 2
        %v891 = vsel %vm687, %v889, %v890
        %v892 = vrot.slane %v829, 2
        %v893 = vsel %vm687, %v890, %v892
        %v894 = vrot.slane %v830, 2
        %v895 = vrot.slane %v831, 2
        %v896 = vsel %vm687, %v894, %v895
        %v897 = vrot.slane %v832, 2
        %v898 = vsel %vm687, %v895, %v897
        %v899 = vrot.slane %v833, 2
        %v900 = vrot.slane %v834, 2
        %v901 = vsel %vm687, %v899, %v900
        %v902 = vrot.slane %v835, 2
        %v903 = vsel %vm687, %v900, %v902
        %v912 = vadd.f32 %v876, %v886
        %v913 = vadd.f32 %v877, %v888
        %v914 = vadd.f32 %v878, %v891
        %v915 = vadd.f32 %v879, %v893
        %v916 = vadd.f32 %v880, %v896
        %v917 = vadd.f32 %v881, %v898
        %v918 = vadd.f32 %v882, %v901
        %v919 = vadd.f32 %v883, %v903
        %v920 = vmul.f32 %v912, 0.11111111
        %v921 = vmul.f32 %v913, 0.11111111
        %v922 = vmul.f32 %v914, 0.11111111
        %v923 = vmul.f32 %v915, 0.11111111
        %v924 = vmul.f32 %v916, 0.11111111
        %v925 = vmul.f32 %v917, 0.11111111
        %v926 = vmul.f32 %v918, 0.11111111
        %v927 = vmul.f32 %v919, 0.11111111
        %v928 = vmul.f32 %v374, %v374
        %v929 = vmul.f32 %v344, %v344
        %v930 = vmul.f32 %v378, %v378
        %v931 = vmul.f32 %v375, %v375
        %v932 = vmul.f32 %v347, %v347
        %v933 = vmul.f32 %v379, %v379
        %v934 = vmul.f32 %v376, %v376
        %v935 = vmul.f32 %v350, %v350
        %v936 = vmul.f32 %v380, %v380
        %v937 = vmul.f32 %v377, %v377
        %v938 = vmul.f32 %v353, %v353
        %v939 = vmul.f32 %v381, %v381
        %952 = vrot.lane.b32.xlu0 %v928, 127
        %v953 = vpop.permute.xlu0 %952
        %954 = vrot.lane.b32.xlu0 %v929, 127
        %v955 = vpop.permute.xlu0 %954
        %956 = vrot.lane.b32.xlu0 %v930, 127
        %v957 = vpop.permute.xlu0 %956
        %958 = vrot.lane.b32.xlu0 %v931, 127
        %v959 = vpop.permute.xlu0 %958
        %960 = vrot.lane.b32.xlu0 %v932, 127
        %v961 = vpop.permute.xlu0 %960
        %962 = vrot.lane.b32.xlu0 %v933, 127
        %v963 = vpop.permute.xlu0 %962
        %964 = vrot.lane.b32.xlu0 %v934, 127
        %v965 = vpop.permute.xlu0 %964
        %966 = vrot.lane.b32.xlu0 %v935, 127
        %v967 = vpop.permute.xlu0 %966
        %968 = vrot.lane.b32.xlu0 %v936, 127
        %v969 = vpop.permute.xlu0 %968
        %970 = vrot.lane.b32.xlu0 %v937, 127
        %v971 = vpop.permute.xlu0 %970
        %972 = vrot.lane.b32.xlu0 %v938, 127
        %v973 = vpop.permute.xlu0 %972
        %974 = vrot.lane.b32.xlu0 %v939, 127
        %v975 = vpop.permute.xlu0 %974
        %v988 = vadd.f32 %v928, %v953
        %v989 = vadd.f32 %v929, %v955
        %v990 = vadd.f32 %v930, %v957
        %v991 = vadd.f32 %v931, %v959
        %v992 = vadd.f32 %v932, %v961
        %v993 = vadd.f32 %v933, %v963
        %v994 = vadd.f32 %v934, %v965
        %v995 = vadd.f32 %v935, %v967
        %v996 = vadd.f32 %v936, %v969
        %v997 = vadd.f32 %v937, %v971
        %v998 = vadd.f32 %v938, %v973
        %v999 = vadd.f32 %v939, %v975
        %1000 = vrot.lane.b32.xlu0 %v928, 126
        %v1001 = vpop.permute.xlu0 %1000
        %1002 = vrot.lane.b32.xlu0 %v929, 126
        %v1003 = vpop.permute.xlu0 %1002
        %1004 = vrot.lane.b32.xlu0 %v930, 126
        %v1005 = vpop.permute.xlu0 %1004
        %1006 = vrot.lane.b32.xlu0 %v931, 126
        %v1007 = vpop.permute.xlu0 %1006
        %1008 = vrot.lane.b32.xlu0 %v932, 126
        %v1009 = vpop.permute.xlu0 %1008
        %1010 = vrot.lane.b32.xlu0 %v933, 126
        %v1011 = vpop.permute.xlu0 %1010
        %1012 = vrot.lane.b32.xlu0 %v934, 126
        %v1013 = vpop.permute.xlu0 %1012
        %1014 = vrot.lane.b32.xlu0 %v935, 126
        %v1015 = vpop.permute.xlu0 %1014
        %1016 = vrot.lane.b32.xlu0 %v936, 126
        %v1017 = vpop.permute.xlu0 %1016
        %1018 = vrot.lane.b32.xlu0 %v937, 126
        %v1019 = vpop.permute.xlu0 %1018
        %1020 = vrot.lane.b32.xlu0 %v938, 126
        %v1021 = vpop.permute.xlu0 %1020
        %1022 = vrot.lane.b32.xlu0 %v939, 126
        %v1023 = vpop.permute.xlu0 %1022
        %v1036 = vadd.f32 %v988, %v1001
        %v1037 = vadd.f32 %v989, %v1003
        %v1038 = vadd.f32 %v990, %v1005
        %v1039 = vadd.f32 %v991, %v1007
        %v1040 = vadd.f32 %v992, %v1009
        %v1041 = vadd.f32 %v993, %v1011
        %v1042 = vadd.f32 %v994, %v1013
        %v1043 = vadd.f32 %v995, %v1015
        %v1044 = vadd.f32 %v996, %v1017
        %v1045 = vadd.f32 %v997, %v1019
        %v1046 = vadd.f32 %v998, %v1021
        %v1047 = vadd.f32 %v999, %v1023
        %v1060 = vrot.slane %v1036, 1
        %v1061 = vrot.slane %v1037, 1
        %v1062 = vsel %vm650, %v1060, %v1061
        %v1063 = vrot.slane %v1038, 1
        %v1064 = vsel %vm650, %v1061, %v1063
        %v1065 = vrot.slane %v1039, 1
        %v1066 = vrot.slane %v1040, 1
        %v1067 = vsel %vm650, %v1065, %v1066
        %v1068 = vrot.slane %v1041, 1
        %v1069 = vsel %vm650, %v1066, %v1068
        %v1070 = vrot.slane %v1042, 1
        %v1071 = vrot.slane %v1043, 1
        %v1072 = vsel %vm650, %v1070, %v1071
        %v1073 = vrot.slane %v1044, 1
        %v1074 = vsel %vm650, %v1071, %v1073
        %v1075 = vrot.slane %v1045, 1
        %v1076 = vrot.slane %v1046, 1
        %v1077 = vsel %vm650, %v1075, %v1076
        %v1078 = vrot.slane %v1047, 1
        %v1079 = vsel %vm650, %v1076, %v1078
        %v1088 = vadd.f32 %v1036, %v1062
        %v1089 = vadd.f32 %v1037, %v1064
        %v1090 = vadd.f32 %v1039, %v1067
        %v1091 = vadd.f32 %v1040, %v1069
        %v1092 = vadd.f32 %v1042, %v1072
        %v1093 = vadd.f32 %v1043, %v1074
        %v1094 = vadd.f32 %v1045, %v1077
        %v1095 = vadd.f32 %v1046, %v1079
        %v1096 = vrot.slane %v1036, 2
        %v1097 = vrot.slane %v1037, 2
        %v1098 = vsel %vm687, %v1096, %v1097
        %v1099 = vrot.slane %v1038, 2
        %v1100 = vsel %vm687, %v1097, %v1099
        %v1101 = vrot.slane %v1039, 2
        %v1102 = vrot.slane %v1040, 2
        %v1103 = vsel %vm687, %v1101, %v1102
        %v1104 = vrot.slane %v1041, 2
        %v1105 = vsel %vm687, %v1102, %v1104
        %v1106 = vrot.slane %v1042, 2
        %v1107 = vrot.slane %v1043, 2
        %v1108 = vsel %vm687, %v1106, %v1107
        %v1109 = vrot.slane %v1044, 2
        %v1110 = vsel %vm687, %v1107, %v1109
        %v1111 = vrot.slane %v1045, 2
        %v1112 = vrot.slane %v1046, 2
        %v1113 = vsel %vm687, %v1111, %v1112
        %v1114 = vrot.slane %v1047, 2
        %v1115 = vsel %vm687, %v1112, %v1114
        %v1124 = vadd.f32 %v1088, %v1098
        %v1125 = vadd.f32 %v1089, %v1100
        %v1126 = vadd.f32 %v1090, %v1103
        %v1127 = vadd.f32 %v1091, %v1105
        %v1128 = vadd.f32 %v1092, %v1108
        %v1129 = vadd.f32 %v1093, %v1110
        %v1130 = vadd.f32 %v1094, %v1113
        %v1131 = vadd.f32 %v1095, %v1115
        %v1132 = vmul.f32 %v1124, 0.11111111
        %v1133 = vmul.f32 %v1125, 0.11111111
        %v1134 = vmul.f32 %v1126, 0.11111111
        %v1135 = vmul.f32 %v1127, 0.11111111
        %v1136 = vmul.f32 %v1128, 0.11111111
        %v1137 = vmul.f32 %v1129, 0.11111111
        %v1138 = vmul.f32 %v1130, 0.11111111
        %v1139 = vmul.f32 %v1131, 0.11111111
        %v1140 = vmul.f32 %v724, %v724
        %v1141 = vmul.f32 %v725, %v725
        %v1142 = vmul.f32 %v726, %v726
        %v1143 = vmul.f32 %v727, %v727
        %v1144 = vmul.f32 %v728, %v728
        %v1145 = vmul.f32 %v729, %v729
        %v1146 = vmul.f32 %v730, %v730
        %v1147 = vmul.f32 %v731, %v731
        %v1148 = vsub.f32 %v1132, %v1140
        %v1149 = vsub.f32 %v1133, %v1141
        %v1150 = vsub.f32 %v1134, %v1142
        %v1151 = vsub.f32 %v1135, %v1143
        %v1152 = vsub.f32 %v1136, %v1144
        %v1153 = vsub.f32 %v1137, %v1145
        %v1154 = vsub.f32 %v1138, %v1146
        %v1155 = vsub.f32 %v1139, %v1147
        %v1156 = vmul.f32 %v526, %v526
        %v1157 = vmul.f32 %v496, %v496
        %v1158 = vmul.f32 %v530, %v530
        %v1159 = vmul.f32 %v527, %v527
        %v1160 = vmul.f32 %v499, %v499
        %v1161 = vmul.f32 %v531, %v531
        %v1162 = vmul.f32 %v528, %v528
        %v1163 = vmul.f32 %v502, %v502
        %v1164 = vmul.f32 %v532, %v532
        %v1165 = vmul.f32 %v529, %v529
        %v1166 = vmul.f32 %v505, %v505
        %v1167 = vmul.f32 %v533, %v533
        %1180 = vrot.lane.b32.xlu0 %v1156, 127
        %v1181 = vpop.permute.xlu0 %1180
        %1182 = vrot.lane.b32.xlu0 %v1157, 127
        %v1183 = vpop.permute.xlu0 %1182
        %1184 = vrot.lane.b32.xlu0 %v1158, 127
        %v1185 = vpop.permute.xlu0 %1184
        %1186 = vrot.lane.b32.xlu0 %v1159, 127
        %v1187 = vpop.permute.xlu0 %1186
        %1188 = vrot.lane.b32.xlu0 %v1160, 127
        %v1189 = vpop.permute.xlu0 %1188
        %1190 = vrot.lane.b32.xlu0 %v1161, 127
        %v1191 = vpop.permute.xlu0 %1190
        %1192 = vrot.lane.b32.xlu0 %v1162, 127
        %v1193 = vpop.permute.xlu0 %1192
        %1194 = vrot.lane.b32.xlu0 %v1163, 127
        %v1195 = vpop.permute.xlu0 %1194
        %1196 = vrot.lane.b32.xlu0 %v1164, 127
        %v1197 = vpop.permute.xlu0 %1196
        %1198 = vrot.lane.b32.xlu0 %v1165, 127
        %v1199 = vpop.permute.xlu0 %1198
        %1200 = vrot.lane.b32.xlu0 %v1166, 127
        %v1201 = vpop.permute.xlu0 %1200
        %1202 = vrot.lane.b32.xlu0 %v1167, 127
        %v1203 = vpop.permute.xlu0 %1202
        %v1216 = vadd.f32 %v1156, %v1181
        %v1217 = vadd.f32 %v1157, %v1183
        %v1218 = vadd.f32 %v1158, %v1185
        %v1219 = vadd.f32 %v1159, %v1187
        %v1220 = vadd.f32 %v1160, %v1189
        %v1221 = vadd.f32 %v1161, %v1191
        %v1222 = vadd.f32 %v1162, %v1193
        %v1223 = vadd.f32 %v1163, %v1195
        %v1224 = vadd.f32 %v1164, %v1197
        %v1225 = vadd.f32 %v1165, %v1199
        %v1226 = vadd.f32 %v1166, %v1201
        %v1227 = vadd.f32 %v1167, %v1203
        %1228 = vrot.lane.b32.xlu0 %v1156, 126
        %v1229 = vpop.permute.xlu0 %1228
        %1230 = vrot.lane.b32.xlu0 %v1157, 126
        %v1231 = vpop.permute.xlu0 %1230
        %1232 = vrot.lane.b32.xlu0 %v1158, 126
        %v1233 = vpop.permute.xlu0 %1232
        %1234 = vrot.lane.b32.xlu0 %v1159, 126
        %v1235 = vpop.permute.xlu0 %1234
        %1236 = vrot.lane.b32.xlu0 %v1160, 126
        %v1237 = vpop.permute.xlu0 %1236
        %1238 = vrot.lane.b32.xlu0 %v1161, 126
        %v1239 = vpop.permute.xlu0 %1238
        %1240 = vrot.lane.b32.xlu0 %v1162, 126
        %v1241 = vpop.permute.xlu0 %1240
        %1242 = vrot.lane.b32.xlu0 %v1163, 126
        %v1243 = vpop.permute.xlu0 %1242
        %1244 = vrot.lane.b32.xlu0 %v1164, 126
        %v1245 = vpop.permute.xlu0 %1244
        %1246 = vrot.lane.b32.xlu0 %v1165, 126
        %v1247 = vpop.permute.xlu0 %1246
        %1248 = vrot.lane.b32.xlu0 %v1166, 126
        %v1249 = vpop.permute.xlu0 %1248
        %1250 = vrot.lane.b32.xlu0 %v1167, 126
        %v1251 = vpop.permute.xlu0 %1250
        %v1264 = vadd.f32 %v1216, %v1229
        %v1265 = vadd.f32 %v1217, %v1231
        %v1266 = vadd.f32 %v1218, %v1233
        %v1267 = vadd.f32 %v1219, %v1235
        %v1268 = vadd.f32 %v1220, %v1237
        %v1269 = vadd.f32 %v1221, %v1239
        %v1270 = vadd.f32 %v1222, %v1241
        %v1271 = vadd.f32 %v1223, %v1243
        %v1272 = vadd.f32 %v1224, %v1245
        %v1273 = vadd.f32 %v1225, %v1247
        %v1274 = vadd.f32 %v1226, %v1249
        %v1275 = vadd.f32 %v1227, %v1251
        %v1288 = vrot.slane %v1264, 1
        %v1289 = vrot.slane %v1265, 1
        %v1290 = vsel %vm650, %v1288, %v1289
        %v1291 = vrot.slane %v1266, 1
        %v1292 = vsel %vm650, %v1289, %v1291
        %v1293 = vrot.slane %v1267, 1
        %v1294 = vrot.slane %v1268, 1
        %v1295 = vsel %vm650, %v1293, %v1294
        %v1296 = vrot.slane %v1269, 1
        %v1297 = vsel %vm650, %v1294, %v1296
        %v1298 = vrot.slane %v1270, 1
        %v1299 = vrot.slane %v1271, 1
        %v1300 = vsel %vm650, %v1298, %v1299
        %v1301 = vrot.slane %v1272, 1
        %v1302 = vsel %vm650, %v1299, %v1301
        %v1303 = vrot.slane %v1273, 1
        %v1304 = vrot.slane %v1274, 1
        %v1305 = vsel %vm650, %v1303, %v1304
        %v1306 = vrot.slane %v1275, 1
        %v1307 = vsel %vm650, %v1304, %v1306
        %v1316 = vadd.f32 %v1264, %v1290
        %v1317 = vadd.f32 %v1265, %v1292
        %v1318 = vadd.f32 %v1267, %v1295
        %v1319 = vadd.f32 %v1268, %v1297
        %v1320 = vadd.f32 %v1270, %v1300
        %v1321 = vadd.f32 %v1271, %v1302
        %v1322 = vadd.f32 %v1273, %v1305
        %v1323 = vadd.f32 %v1274, %v1307
        %v1324 = vrot.slane %v1264, 2
        %v1325 = vrot.slane %v1265, 2
        %v1326 = vsel %vm687, %v1324, %v1325
        %v1327 = vrot.slane %v1266, 2
        %v1328 = vsel %vm687, %v1325, %v1327
        %v1329 = vrot.slane %v1267, 2
        %v1330 = vrot.slane %v1268, 2
        %v1331 = vsel %vm687, %v1329, %v1330
        %v1332 = vrot.slane %v1269, 2
        %v1333 = vsel %vm687, %v1330, %v1332
        %v1334 = vrot.slane %v1270, 2
        %v1335 = vrot.slane %v1271, 2
        %v1336 = vsel %vm687, %v1334, %v1335
        %v1337 = vrot.slane %v1272, 2
        %v1338 = vsel %vm687, %v1335, %v1337
        %v1339 = vrot.slane %v1273, 2
        %v1340 = vrot.slane %v1274, 2
        %v1341 = vsel %vm687, %v1339, %v1340
        %v1342 = vrot.slane %v1275, 2
        %v1343 = vsel %vm687, %v1340, %v1342
        %v1352 = vadd.f32 %v1316, %v1326
        %v1353 = vadd.f32 %v1317, %v1328
        %v1354 = vadd.f32 %v1318, %v1331
        %v1355 = vadd.f32 %v1319, %v1333
        %v1356 = vadd.f32 %v1320, %v1336
        %v1357 = vadd.f32 %v1321, %v1338
        %v1358 = vadd.f32 %v1322, %v1341
        %v1359 = vadd.f32 %v1323, %v1343
        %v1360 = vmul.f32 %v1352, 0.11111111
        %v1361 = vmul.f32 %v1353, 0.11111111
        %v1362 = vmul.f32 %v1354, 0.11111111
        %v1363 = vmul.f32 %v1355, 0.11111111
        %v1364 = vmul.f32 %v1356, 0.11111111
        %v1365 = vmul.f32 %v1357, 0.11111111
        %v1366 = vmul.f32 %v1358, 0.11111111
        %v1367 = vmul.f32 %v1359, 0.11111111
        %v1368 = vmul.f32 %v920, %v920
        %v1369 = vmul.f32 %v921, %v921
        %v1370 = vmul.f32 %v922, %v922
        %v1371 = vmul.f32 %v923, %v923
        %v1372 = vmul.f32 %v924, %v924
        %v1373 = vmul.f32 %v925, %v925
        %v1374 = vmul.f32 %v926, %v926
        %v1375 = vmul.f32 %v927, %v927
        %v1376 = vsub.f32 %v1360, %v1368
        %v1377 = vsub.f32 %v1361, %v1369
        %v1378 = vsub.f32 %v1362, %v1370
        %v1379 = vsub.f32 %v1363, %v1371
        %v1380 = vsub.f32 %v1364, %v1372
        %v1381 = vsub.f32 %v1365, %v1373
        %v1382 = vsub.f32 %v1366, %v1374
        %v1383 = vsub.f32 %v1367, %v1375
        %v1384 = vmul.f32 %v374, %v526
        %v1385 = vmul.f32 %v344, %v496
        %v1386 = vmul.f32 %v378, %v530
        %v1387 = vmul.f32 %v375, %v527
        %v1388 = vmul.f32 %v347, %v499
        %v1389 = vmul.f32 %v379, %v531
        %v1390 = vmul.f32 %v376, %v528
        %v1391 = vmul.f32 %v350, %v502
        %v1392 = vmul.f32 %v380, %v532
        %v1393 = vmul.f32 %v377, %v529
        %v1394 = vmul.f32 %v353, %v505
        %v1395 = vmul.f32 %v381, %v533
        %1408 = vrot.lane.b32.xlu0 %v1384, 127
        %v1409 = vpop.permute.xlu0 %1408
        %1410 = vrot.lane.b32.xlu0 %v1385, 127
        %v1411 = vpop.permute.xlu0 %1410
        %1412 = vrot.lane.b32.xlu0 %v1386, 127
        %v1413 = vpop.permute.xlu0 %1412
        %1414 = vrot.lane.b32.xlu0 %v1387, 127
        %v1415 = vpop.permute.xlu0 %1414
        %1416 = vrot.lane.b32.xlu0 %v1388, 127
        %v1417 = vpop.permute.xlu0 %1416
        %1418 = vrot.lane.b32.xlu0 %v1389, 127
        %v1419 = vpop.permute.xlu0 %1418
        %1420 = vrot.lane.b32.xlu0 %v1390, 127
        %v1421 = vpop.permute.xlu0 %1420
        %1422 = vrot.lane.b32.xlu0 %v1391, 127
        %v1423 = vpop.permute.xlu0 %1422
        %1424 = vrot.lane.b32.xlu0 %v1392, 127
        %v1425 = vpop.permute.xlu0 %1424
        %1426 = vrot.lane.b32.xlu0 %v1393, 127
        %v1427 = vpop.permute.xlu0 %1426
        %1428 = vrot.lane.b32.xlu0 %v1394, 127
        %v1429 = vpop.permute.xlu0 %1428
        %1430 = vrot.lane.b32.xlu0 %v1395, 127
        %v1431 = vpop.permute.xlu0 %1430
        %v1444 = vadd.f32 %v1384, %v1409
        %v1445 = vadd.f32 %v1385, %v1411
        %v1446 = vadd.f32 %v1386, %v1413
        %v1447 = vadd.f32 %v1387, %v1415
        %v1448 = vadd.f32 %v1388, %v1417
        %v1449 = vadd.f32 %v1389, %v1419
        %v1450 = vadd.f32 %v1390, %v1421
        %v1451 = vadd.f32 %v1391, %v1423
        %v1452 = vadd.f32 %v1392, %v1425
        %v1453 = vadd.f32 %v1393, %v1427
        %v1454 = vadd.f32 %v1394, %v1429
        %v1455 = vadd.f32 %v1395, %v1431
        %1456 = vrot.lane.b32.xlu0 %v1384, 126
        %v1457 = vpop.permute.xlu0 %1456
        %1458 = vrot.lane.b32.xlu0 %v1385, 126
        %v1459 = vpop.permute.xlu0 %1458
        %1460 = vrot.lane.b32.xlu0 %v1386, 126
        %v1461 = vpop.permute.xlu0 %1460
        %1462 = vrot.lane.b32.xlu0 %v1387, 126
        %v1463 = vpop.permute.xlu0 %1462
        %1464 = vrot.lane.b32.xlu0 %v1388, 126
        %v1465 = vpop.permute.xlu0 %1464
        %1466 = vrot.lane.b32.xlu0 %v1389, 126
        %v1467 = vpop.permute.xlu0 %1466
        %1468 = vrot.lane.b32.xlu0 %v1390, 126
        %v1469 = vpop.permute.xlu0 %1468
        %1470 = vrot.lane.b32.xlu0 %v1391, 126
        %v1471 = vpop.permute.xlu0 %1470
        %1472 = vrot.lane.b32.xlu0 %v1392, 126
        %v1473 = vpop.permute.xlu0 %1472
        %1474 = vrot.lane.b32.xlu0 %v1393, 126
        %v1475 = vpop.permute.xlu0 %1474
        %1476 = vrot.lane.b32.xlu0 %v1394, 126
        %v1477 = vpop.permute.xlu0 %1476
        %1478 = vrot.lane.b32.xlu0 %v1395, 126
        %v1479 = vpop.permute.xlu0 %1478
        %v1492 = vadd.f32 %v1444, %v1457
        %v1493 = vadd.f32 %v1445, %v1459
        %v1494 = vadd.f32 %v1446, %v1461
        %v1495 = vadd.f32 %v1447, %v1463
        %v1496 = vadd.f32 %v1448, %v1465
        %v1497 = vadd.f32 %v1449, %v1467
        %v1498 = vadd.f32 %v1450, %v1469
        %v1499 = vadd.f32 %v1451, %v1471
        %v1500 = vadd.f32 %v1452, %v1473
        %v1501 = vadd.f32 %v1453, %v1475
        %v1502 = vadd.f32 %v1454, %v1477
        %v1503 = vadd.f32 %v1455, %v1479
        %v1516 = vrot.slane %v1492, 1
        %v1517 = vrot.slane %v1493, 1
        %v1518 = vsel %vm650, %v1516, %v1517
        %v1519 = vrot.slane %v1494, 1
        %v1520 = vsel %vm650, %v1517, %v1519
        %v1521 = vrot.slane %v1495, 1
        %v1522 = vrot.slane %v1496, 1
        %v1523 = vsel %vm650, %v1521, %v1522
        %v1524 = vrot.slane %v1497, 1
        %v1525 = vsel %vm650, %v1522, %v1524
        %v1526 = vrot.slane %v1498, 1
        %v1527 = vrot.slane %v1499, 1
        %v1528 = vsel %vm650, %v1526, %v1527
        %v1529 = vrot.slane %v1500, 1
        %v1530 = vsel %vm650, %v1527, %v1529
        %v1531 = vrot.slane %v1501, 1
        %v1532 = vrot.slane %v1502, 1
        %v1533 = vsel %vm650, %v1531, %v1532
        %v1534 = vrot.slane %v1503, 1
        %v1535 = vsel %vm650, %v1532, %v1534
        %v1544 = vadd.f32 %v1492, %v1518
        %v1545 = vadd.f32 %v1493, %v1520
        %v1546 = vadd.f32 %v1495, %v1523
        %v1547 = vadd.f32 %v1496, %v1525
        %v1548 = vadd.f32 %v1498, %v1528
        %v1549 = vadd.f32 %v1499, %v1530
        %v1550 = vadd.f32 %v1501, %v1533
        %v1551 = vadd.f32 %v1502, %v1535
        %v1552 = vrot.slane %v1492, 2
        %v1553 = vrot.slane %v1493, 2
        %v1554 = vsel %vm687, %v1552, %v1553
        %v1555 = vrot.slane %v1494, 2
        %v1556 = vsel %vm687, %v1553, %v1555
        %v1557 = vrot.slane %v1495, 2
        %v1558 = vrot.slane %v1496, 2
        %v1559 = vsel %vm687, %v1557, %v1558
        %v1560 = vrot.slane %v1497, 2
        %v1561 = vsel %vm687, %v1558, %v1560
        %v1562 = vrot.slane %v1498, 2
        %v1563 = vrot.slane %v1499, 2
        %v1564 = vsel %vm687, %v1562, %v1563
        %v1565 = vrot.slane %v1500, 2
        %v1566 = vsel %vm687, %v1563, %v1565
        %v1567 = vrot.slane %v1501, 2
        %v1568 = vrot.slane %v1502, 2
        %v1569 = vsel %vm687, %v1567, %v1568
        %v1570 = vrot.slane %v1503, 2
        %v1571 = vsel %vm687, %v1568, %v1570
        %v1580 = vadd.f32 %v1544, %v1554
        %v1581 = vadd.f32 %v1545, %v1556
        %v1582 = vadd.f32 %v1546, %v1559
        %v1583 = vadd.f32 %v1547, %v1561
        %v1584 = vadd.f32 %v1548, %v1564
        %v1585 = vadd.f32 %v1549, %v1566
        %v1586 = vadd.f32 %v1550, %v1569
        %v1587 = vadd.f32 %v1551, %v1571
        %v1588 = vmul.f32 %v1580, 0.11111111
        %v1589 = vmul.f32 %v1581, 0.11111111
        %v1590 = vmul.f32 %v1582, 0.11111111
        %v1591 = vmul.f32 %v1583, 0.11111111
        %v1592 = vmul.f32 %v1584, 0.11111111
        %v1593 = vmul.f32 %v1585, 0.11111111
        %v1594 = vmul.f32 %v1586, 0.11111111
        %v1595 = vmul.f32 %v1587, 0.11111111
        %v1596 = vmul.f32 %v724, %v920
        %v1597 = vmul.f32 %v725, %v921
        %v1598 = vmul.f32 %v726, %v922
        %v1599 = vmul.f32 %v727, %v923
        %v1600 = vmul.f32 %v728, %v924
        %v1601 = vmul.f32 %v729, %v925
        %v1602 = vmul.f32 %v730, %v926
        %v1603 = vmul.f32 %v731, %v927
        %v1604 = vsub.f32 %v1588, %v1596
        %v1605 = vsub.f32 %v1589, %v1597
        %v1606 = vsub.f32 %v1590, %v1598
        %v1607 = vsub.f32 %v1591, %v1599
        %v1608 = vsub.f32 %v1592, %v1600
        %v1609 = vsub.f32 %v1593, %v1601
        %v1610 = vsub.f32 %v1594, %v1602
        %v1611 = vsub.f32 %v1595, %v1603
        %v1612 = vmul.f32 %v724, 2.0
        %v1613 = vmul.f32 %v725, 2.0
        %v1614 = vmul.f32 %v726, 2.0
        %v1615 = vmul.f32 %v727, 2.0
        %v1616 = vmul.f32 %v728, 2.0
        %v1617 = vmul.f32 %v729, 2.0
        %v1618 = vmul.f32 %v730, 2.0
        %v1619 = vmul.f32 %v731, 2.0
        %v1620 = vmul.f32 %v1612, %v920
        %v1621 = vmul.f32 %v1613, %v921
        %v1622 = vmul.f32 %v1614, %v922
        %v1623 = vmul.f32 %v1615, %v923
        %v1624 = vmul.f32 %v1616, %v924
        %v1625 = vmul.f32 %v1617, %v925
        %v1626 = vmul.f32 %v1618, %v926
        %v1627 = vmul.f32 %v1619, %v927
        %v1628 = vadd.f32 %v1620, 0.0001
        %v1629 = vadd.f32 %v1621, 0.0001
        %v1630 = vadd.f32 %v1622, 0.0001
        %v1631 = vadd.f32 %v1623, 0.0001
        %v1632 = vadd.f32 %v1624, 0.0001
        %v1633 = vadd.f32 %v1625, 0.0001
        %v1634 = vadd.f32 %v1626, 0.0001
        %v1635 = vadd.f32 %v1627, 0.0001
        %v1636 = vmul.f32 %v1604, 2.0
        %v1637 = vmul.f32 %v1605, 2.0
        %v1638 = vmul.f32 %v1606, 2.0
        %v1639 = vmul.f32 %v1607, 2.0
        %v1640 = vmul.f32 %v1608, 2.0
        %v1641 = vmul.f32 %v1609, 2.0
        %v1642 = vmul.f32 %v1610, 2.0
        %v1643 = vmul.f32 %v1611, 2.0
        %v1644 = vadd.f32 %v1636, 0.0009
        %v1645 = vadd.f32 %v1637, 0.0009
        %v1646 = vadd.f32 %v1638, 0.0009
        %v1647 = vadd.f32 %v1639, 0.0009
        %v1648 = vadd.f32 %v1640, 0.0009
        %v1649 = vadd.f32 %v1641, 0.0009
        %v1650 = vadd.f32 %v1642, 0.0009
        %v1651 = vadd.f32 %v1643, 0.0009
        %v1652 = vmul.f32 %v1628, %v1644
        %v1653 = vmul.f32 %v1629, %v1645
        %v1654 = vmul.f32 %v1630, %v1646
        %v1655 = vmul.f32 %v1631, %v1647
        %v1656 = vmul.f32 %v1632, %v1648
        %v1657 = vmul.f32 %v1633, %v1649
        %v1658 = vmul.f32 %v1634, %v1650
        %v1659 = vmul.f32 %v1635, %v1651
        %v1660 = vadd.f32 %v1140, %v1368
        %v1661 = vadd.f32 %v1141, %v1369
        %v1662 = vadd.f32 %v1142, %v1370
        %v1663 = vadd.f32 %v1143, %v1371
        %v1664 = vadd.f32 %v1144, %v1372
        %v1665 = vadd.f32 %v1145, %v1373
        %v1666 = vadd.f32 %v1146, %v1374
        %v1667 = vadd.f32 %v1147, %v1375
        %v1668 = vadd.f32 %v1660, 0.0001
        %v1669 = vadd.f32 %v1661, 0.0001
        %v1670 = vadd.f32 %v1662, 0.0001
        %v1671 = vadd.f32 %v1663, 0.0001
        %v1672 = vadd.f32 %v1664, 0.0001
        %v1673 = vadd.f32 %v1665, 0.0001
        %v1674 = vadd.f32 %v1666, 0.0001
        %v1675 = vadd.f32 %v1667, 0.0001
        %v1676 = vadd.f32 %v1148, %v1376
        %v1677 = vadd.f32 %v1149, %v1377
        %v1678 = vadd.f32 %v1150, %v1378
        %v1679 = vadd.f32 %v1151, %v1379
        %v1680 = vadd.f32 %v1152, %v1380
        %v1681 = vadd.f32 %v1153, %v1381
        %v1682 = vadd.f32 %v1154, %v1382
        %v1683 = vadd.f32 %v1155, %v1383
        %v1684 = vadd.f32 %v1676, 0.0009
        %v1685 = vadd.f32 %v1677, 0.0009
        %v1686 = vadd.f32 %v1678, 0.0009
        %v1687 = vadd.f32 %v1679, 0.0009
        %v1688 = vadd.f32 %v1680, 0.0009
        %v1689 = vadd.f32 %v1681, 0.0009
        %v1690 = vadd.f32 %v1682, 0.0009
        %v1691 = vadd.f32 %v1683, 0.0009
        %v1692 = vmul.f32 %v1668, %v1684
        %v1693 = vmul.f32 %v1669, %v1685
        %v1694 = vmul.f32 %v1670, %v1686
        %v1695 = vmul.f32 %v1671, %v1687
        %v1696 = vmul.f32 %v1672, %v1688
        %v1697 = vmul.f32 %v1673, %v1689
        %v1698 = vmul.f32 %v1674, %v1690
        %v1699 = vmul.f32 %v1675, %v1691
        %v1700 = vrcp.pop %v1692
        %v1701 = vmul.f32 %v1692, %v1700
        %v1702 = vsub.f32 1.0, %v1701
        %v1703 = vmul.f32 %v1700, %v1702
        %v1704 = vadd.f32 %v1700, %v1703
        %vm1705 = vweird.f32 %v1692
        %vm1706 = vweird.f32 %v1700
        %vm1707 = vmor %vm1705, %vm1706
        %v1708 = vsel %vm1707, %v1700, %v1704
        %v1709 = vand.u32 2147483647, %v1692
        %vm1710 = vcmp.eq.f32.partialorder %v1709, 8.507059e+37
        %v1711 = vand.u32 %v1692, 2147483648
        %v1712 = vor.u32 1.1754944e-38, %v1711
        %v1713 = vsel %vm1710, %v1712, %v1708
        %v1714 = vmul.f32 %v1652, %v1713
        %v1715 = vrcp.pop %v1693
        %v1716 = vmul.f32 %v1693, %v1715
        %v1717 = vsub.f32 1.0, %v1716
        %v1718 = vmul.f32 %v1715, %v1717
        %v1719 = vadd.f32 %v1715, %v1718
        %vm1720 = vweird.f32 %v1693
        %vm1721 = vweird.f32 %v1715
        %vm1722 = vmor %vm1720, %vm1721
        %v1723 = vsel %vm1722, %v1715, %v1719
        %v1724 = vand.u32 2147483647, %v1693
        %vm1725 = vcmp.eq.f32.partialorder %v1724, 8.507059e+37
        %v1726 = vand.u32 %v1693, 2147483648
        %v1727 = vor.u32 1.1754944e-38, %v1726
        %v1728 = vsel %vm1725, %v1727, %v1723
        %v1729 = vmul.f32 %v1653, %v1728
        %v1730 = vrcp.pop %v1694
        %v1731 = vmul.f32 %v1694, %v1730
        %v1732 = vsub.f32 1.0, %v1731
        %v1733 = vmul.f32 %v1730, %v1732
        %v1734 = vadd.f32 %v1730, %v1733
        %vm1735 = vweird.f32 %v1694
        %vm1736 = vweird.f32 %v1730
        %vm1737 = vmor %vm1735, %vm1736
        %v1738 = vsel %vm1737, %v1730, %v1734
        %v1739 = vand.u32 2147483647, %v1694
        %vm1740 = vcmp.eq.f32.partialorder %v1739, 8.507059e+37
        %v1741 = vand.u32 %v1694, 2147483648
        %v1742 = vor.u32 1.1754944e-38, %v1741
        %v1743 = vsel %vm1740, %v1742, %v1738
        %v1744 = vmul.f32 %v1654, %v1743
        %v1745 = vrcp.pop %v1695
        %v1746 = vmul.f32 %v1695, %v1745
        %v1747 = vsub.f32 1.0, %v1746
        %v1748 = vmul.f32 %v1745, %v1747
        %v1749 = vadd.f32 %v1745, %v1748
        %vm1750 = vweird.f32 %v1695
        %vm1751 = vweird.f32 %v1745
        %vm1752 = vmor %vm1750, %vm1751
        %v1753 = vsel %vm1752, %v1745, %v1749
        %v1754 = vand.u32 2147483647, %v1695
        %vm1755 = vcmp.eq.f32.partialorder %v1754, 8.507059e+37
        %v1756 = vand.u32 %v1695, 2147483648
        %v1757 = vor.u32 1.1754944e-38, %v1756
        %v1758 = vsel %vm1755, %v1757, %v1753
        %v1759 = vmul.f32 %v1655, %v1758
        %v1760 = vrcp.pop %v1696
        %v1761 = vmul.f32 %v1696, %v1760
        %v1762 = vsub.f32 1.0, %v1761
        %v1763 = vmul.f32 %v1760, %v1762
        %v1764 = vadd.f32 %v1760, %v1763
        %vm1765 = vweird.f32 %v1696
        %vm1766 = vweird.f32 %v1760
        %vm1767 = vmor %vm1765, %vm1766
        %v1768 = vsel %vm1767, %v1760, %v1764
        %v1769 = vand.u32 2147483647, %v1696
        %vm1770 = vcmp.eq.f32.partialorder %v1769, 8.507059e+37
        %v1771 = vand.u32 %v1696, 2147483648
        %v1772 = vor.u32 1.1754944e-38, %v1771
        %v1773 = vsel %vm1770, %v1772, %v1768
        %v1774 = vmul.f32 %v1656, %v1773
        %v1775 = vrcp.pop %v1697
        %v1776 = vmul.f32 %v1697, %v1775
        %v1777 = vsub.f32 1.0, %v1776
        %v1778 = vmul.f32 %v1775, %v1777
        %v1779 = vadd.f32 %v1775, %v1778
        %vm1780 = vweird.f32 %v1697
        %vm1781 = vweird.f32 %v1775
        %vm1782 = vmor %vm1780, %vm1781
        %v1783 = vsel %vm1782, %v1775, %v1779
        %v1784 = vand.u32 2147483647, %v1697
        %vm1785 = vcmp.eq.f32.partialorder %v1784, 8.507059e+37
        %v1786 = vand.u32 %v1697, 2147483648
        %v1787 = vor.u32 1.1754944e-38, %v1786
        %v1788 = vsel %vm1785, %v1787, %v1783
        %v1789 = vmul.f32 %v1657, %v1788
        %v1790 = vrcp.pop %v1698
        %v1791 = vmul.f32 %v1698, %v1790
        %v1792 = vsub.f32 1.0, %v1791
        %v1793 = vmul.f32 %v1790, %v1792
        %v1794 = vadd.f32 %v1790, %v1793
        %vm1795 = vweird.f32 %v1698
        %vm1796 = vweird.f32 %v1790
        %vm1797 = vmor %vm1795, %vm1796
        %v1798 = vsel %vm1797, %v1790, %v1794
        %v1799 = vand.u32 2147483647, %v1698
        %vm1800 = vcmp.eq.f32.partialorder %v1799, 8.507059e+37
        %v1801 = vand.u32 %v1698, 2147483648
        %v1802 = vor.u32 1.1754944e-38, %v1801
        %v1803 = vsel %vm1800, %v1802, %v1798
        %v1804 = vmul.f32 %v1658, %v1803
        %v1805 = vrcp.pop %v1699
        %v1806 = vmul.f32 %v1699, %v1805
        %v1807 = vsub.f32 1.0, %v1806
        %v1808 = vmul.f32 %v1805, %v1807
        %v1809 = vadd.f32 %v1805, %v1808
        %vm1810 = vweird.f32 %v1699
        %vm1811 = vweird.f32 %v1805
        %vm1812 = vmor %vm1810, %vm1811
        %v1813 = vsel %vm1812, %v1805, %v1809
        %v1814 = vand.u32 2147483647, %v1699
        %vm1815 = vcmp.eq.f32.partialorder %v1814, 8.507059e+37
        %v1816 = vand.u32 %v1699, 2147483648
        %v1817 = vor.u32 1.1754944e-38, %v1816
        %v1818 = vsel %vm1815, %v1817, %v1813
        %v1819 = vmul.f32 %v1659, %v1818
        %v1820 = vsub.f32 1.0, %v1714
        %v1821 = vsub.f32 1.0, %v1729
        %v1822 = vsub.f32 1.0, %v1744
        %v1823 = vsub.f32 1.0, %v1759
        %v1824 = vsub.f32 1.0, %v1774
        %v1825 = vsub.f32 1.0, %v1789
        %v1826 = vsub.f32 1.0, %v1804
        %v1827 = vsub.f32 1.0, %v1819
        %v1828 = vmul.f32 %v1820, 0.5
        %v1829 = vmul.f32 %v1821, 0.5
        %v1830 = vmul.f32 %v1822, 0.5
        %v1831 = vmul.f32 %v1823, 0.5
        %v1832 = vmul.f32 %v1824, 0.5
        %v1833 = vmul.f32 %v1825, 0.5
        %v1834 = vmul.f32 %v1826, 0.5
        %v1835 = vmul.f32 %v1827, 0.5
        %v1836 = vmax.f32 %v1828, 0.0
        %v1837 = vmax.f32 %v1829, 0.0
        %v1838 = vmax.f32 %v1830, 0.0
        %v1839 = vmax.f32 %v1831, 0.0
        %v1840 = vmax.f32 %v1832, 0.0
        %v1841 = vmax.f32 %v1833, 0.0
        %v1842 = vmax.f32 %v1834, 0.0
        %v1843 = vmax.f32 %v1835, 0.0
        %v1844 = vmin.f32 %v1836, 1.0
        %v1845 = vmin.f32 %v1837, 1.0
        %v1846 = vmin.f32 %v1838, 1.0
        %v1847 = vmin.f32 %v1839, 1.0
        %v1848 = vmin.f32 %v1840, 1.0
        %v1849 = vmin.f32 %v1841, 1.0
        %v1850 = vmin.f32 %v1842, 1.0
        %v1851 = vmin.f32 %v1843, 1.0
        %vm1852 = vcmask 130048
        %1853 = vst.msk [vmem:[%s207] sm:$0xff] %vm1852, %v1844
        %1854 = vst.msk [vmem:[%s207 + $0x8] sm:$0xff] %vm1852, %v1845
        %1855 = vst.msk [vmem:[%s207 + $0x10] sm:$0xff] %vm1852, %v1846
        %1856 = vst.msk [vmem:[%s207 + $0x18] sm:$0xff] %vm1852, %v1847
        %1857 = vst.msk [vmem:[%s207 + $0x20] sm:$0xff] %vm1852, %v1848
        %1858 = vst.msk [vmem:[%s207 + $0x28] sm:$0xff] %vm1852, %v1849
        %1859 = vst.msk [vmem:[%s207 + $0x30] sm:$0xff] %vm1852, %v1850
        %1860 = vst.msk [vmem:[%s207 + $0x38] sm:$0xff] %vm1852, %v1851
        %s1861 = sand.u32 %s82, 1
        %s1862 = scalar_lea.sflag [#allocation4], %s1861
        %s1863 = sand.u32 %s82, 1
        %s1864 = smul.addr %s1863, 64
        %s1865 = scalar_lea.vmem [#allocation7], %s1864
        // Predicated region
        $region37: #{tpu_custom_call.1} parent=27 // pred_check
          %p1866 = pneg %p92
        $region38: #{tpu_custom_call.1} parent=27 // pred_check_branch
          %1868 = sbr.rel (%p1866) target = $region40
        $region39: #{tpu_custom_call.1} parent=27 // pred_region
          %s1869 = smul.u32 4, %s22
          %1871 = vsyncadd %s1862, 0
          %s1872 = smul.addr %s1869, 2
          %s1873 = smul.addr %s1872, 8
          %s1874 = scalar_lea.hbm %s2, %s1873
          %s1875 = sshll.u32 %s1865, 4
          %s1876 = int_to_ptr.vmem [resolvable:$true] %s1875
          %s1877 = sshll.u32 %s1874, 4
          %s1878 = int_to_ptr.hbm [resolvable:$true] %s1877
          %1883 = dma.vmem_to_hbm [thread:$0]  %s1876, 1024, %s1878, %s1862, 128, 128, 8
        $region40: #{tpu_custom_call.1} parent=27 // pred_fallthru
          _
      $region28: #{tpu_custom_call.1} parent=5 // pred_fallthru
        _
      %p1884 = scmp.le.s32.totalorder 2, %s17
      // Predicated region
      $region41: #{tpu_custom_call.1} parent=5 // pred_check
        %p1885 = pneg %p1884
      $region42: #{tpu_custom_call.1} parent=5 // pred_check_branch
        %1887 = sbr.rel (%p1885) target = $region44
      $region43: #{tpu_custom_call.1} parent=5 // pred_region
        %s1888 = ssub.s32 %s17, 2
        // Predicated region
        $region45: #{tpu_custom_call.1} parent=43 // pred_check
          %p1889 = pneg %p98
        $region46: #{tpu_custom_call.1} parent=43 // pred_check_branch
          %1891 = sbr.rel (%p1889) target = $region48
        $region47: #{tpu_custom_call.1} parent=43 // pred_region
          %s1892 = sand.u32 %s83, 1
          %s1893 = scalar_lea.sflag [#allocation4], %s1892
          %s1894 = sand.u32 %s83, 1
          %s1895 = smul.addr %s1894, 64
          %s1896 = scalar_lea.vmem [#allocation7], %s1895
          %1898 = dma.done %s1893, 1024
        $region48: #{tpu_custom_call.1} parent=43 // pred_fallthru
          _
      $region44: #{tpu_custom_call.1} parent=5 // pred_fallthru
        _
    $region6: #{tpu_custom_call.1} parent=1 // loop_footer
      %s21 = sadd.s32 1, %s17
    $region7: #{tpu_custom_call.1} parent=1 // loop_footer_branch
      %16 = sbr.rel target = $region3
    $region8: #{tpu_custom_call.1} parent=1 // loop_exit
      _
    %1899 = vsyncpa [#allocation3], 1
    %s1900 = scalar_lea.sflag [#allocation3], 1
    %1901 = vsyncpa %s1900, 1
    %1902 = vsyncpa [#allocation6], 1
    %s1903 = scalar_lea.sflag [#allocation6], 1
    %1904 = vsyncpa %s1903, 1
    %1905 = vsyncpa [#allocation4], 1
    %s1906 = scalar_lea.sflag [#allocation4], 1
    %1907 = vsyncpa %s1906, 1

</llo_original>
